<compile_context>
chip_gen: v6e
topology: v6e:2x2x1
jax: 0.10.0
libtpu: 0.0.40
codegen_flags: <defaults>
</compile_context>

<pallas_src>
import jax
import jax.numpy as jnp
from jax.experimental import pallas as pl
from jax.experimental.pallas import tpu as pltpu


def _dbhead_categorize_kernel(xcol_ref, w1_ref, o1_ref,
                              w2_ref, o2_ref,
                              w3_ref, b3_ref, gsum_ref, out_ref):
    # --- Conv2d 3x3 as one im2col matmul (BN scale folded into w1) + ReLU ----
    y1 = jnp.dot(xcol_ref[0], w1_ref[...], preferred_element_type=jnp.float32)
    y1 = jnp.maximum(y1 + o1_ref[...], 0.0)                          # (TM, Ci) f32

    # --- ConvT(2,2) #1: 4 sub-pixels fused along lanes; BN scale folded into
    #     w2, conv bias folded into the offset ---------------------------------
    y2 = jnp.dot(y1.astype(jnp.bfloat16), w2_ref[...],
                 preferred_element_type=jnp.float32)
    y2 = jnp.maximum(y2 + o2_ref[...], 0.0)                          # (TM, 4*Ci) f32

    # --- ConvT(2,2) #2: all 16 sub-pixels x 8 channels in ONE lane-dense matmul
    z = jnp.dot(y2.astype(jnp.bfloat16), w3_ref[...],
                preferred_element_type=jnp.float32) + b3_ref[...]    # (TM, 128) f32

    # --- Segmented softmax over each aligned 8-lane channel group ------------
    # A single per-row max shift is exact for every group (it cancels in the
    # ratio); the per-group denominator is one block-diagonal MXU matmul.
    m = jnp.max(z, axis=-1, keepdims=True)
    e = jnp.exp(z - m)
    denom = jnp.dot(e, gsum_ref[...], preferred_element_type=jnp.float32)
    out_ref[0] = (e * pl.reciprocal(denom, approx=True)).astype(out_ref.dtype)


def _pick_tile_rows(hw, cin, ci, vmem_budget=12 * 1024 * 1024):
    """Largest row tile that divides H*W, is a multiple of 8, and keeps the
    double-buffered input/output tiles plus f32 intermediates inside a VMEM budget."""
    per_row = (2 * 9 * cin * 2                     # xcol tile, bf16, double-buffered
               + 2 * 128 * 4                       # output tile, f32, double-buffered
               + (ci + 4 * ci + 2 * 128) * 4)      # y1 / y2 / z / e intermediates, f32
    cap = max(64, min(2048, vmem_budget // max(per_row, 1)))
    cap -= cap % 8
    if hw <= cap:
        return hw
    for t in range(cap, 7, -8):
        if hw % t == 0:
            return t
    return hw   # full-extent fallback (always layout-legal)


def _prepare_kernel_params(p, Cin, Ci):
    """Fuse / fold the module parameters into the lane-dense layout the kernel eats.
    BN (eval mode) is folded as  y*s + o  ==  dot(x, w*s) + o,  so the MXU weights
    carry the scale and the kernel only adds the offset."""
    # Conv 3x3 in im2col form, BN scale folded in (bf16 for the MXU / HBM side).
    k_w1col = (p["w1"].reshape(9 * Cin, Ci) * p["s1"][None, :]).astype(jnp.bfloat16)
    k_o1 = p["o1"].reshape(1, Ci)
    # Stage-2 ConvT: 4 sub-pixel matrices concatenated along lanes; BN scale folded
    # into the weights, conv bias folded into the BN offset (o2' = b2*s2 + o2).
    w2cat = jnp.concatenate([p["w2"][r] for r in range(4)], axis=1)        # (Ci, 4*Ci)
    s2cat = jnp.tile(p["s2"], 4)
    k_w2cat = (w2cat * s2cat[None, :]).astype(jnp.bfloat16)
    k_o2cat = jnp.tile(p["b2"] * p["s2"] + p["o2"], 4).reshape(1, 4 * Ci)
    # Stage-3 ConvT: block-structured (4*Ci, 128) so one matmul emits the full
    # lane-dense slab; out lane = pp*32 + qq*8 + channel for sub-pixel (pp, qq).
    w3big = jnp.zeros((4 * Ci, 128), jnp.float32)
    for pp in range(4):
        for qq in range(4):
            di, ei = pp // 2, pp % 2
            dj, ej = qq // 2, qq % 2
            r2 = di * 2 + dj
            w3big = w3big.at[r2 * Ci:(r2 + 1) * Ci,
                             pp * 32 + qq * 8: pp * 32 + qq * 8 + 8].set(
                                 p["w3"][ei * 2 + ej])
    k_b3big = jnp.tile(p["b3"], 16).reshape(1, 128)
    # Block-diagonal 0/1 matrix: broadcast per-8-lane-group sum (softmax denom).
    lane = jnp.arange(128)
    k_gsum = (lane[:, None] // 8 == lane[None, :] // 8).astype(jnp.float32)
    return dict(
        k_w1col=k_w1col, k_o1=k_o1,
        k_w2cat=k_w2cat, k_o2cat=k_o2cat,
        k_w3big=w3big.astype(jnp.bfloat16), k_b3big=k_b3big, k_gsum=k_gsum)


def dbhead_test_forward(x_nchw, params):
    B, Cin, H, W = x_nchw.shape
    Ci = params["k_o1"].shape[-1]
    HW = H * W
    TM = _pick_tile_rows(HW, Cin, Ci)

    # Layout glue (no FLOPs): NCHW -> NHWC in bf16, pad, im2col.
    x = jnp.transpose(x_nchw, (0, 2, 3, 1)).astype(jnp.bfloat16)
    xp = jnp.pad(x, ((0, 0), (1, 1), (1, 1), (0, 0)))
    patches = [xp[:, dy:dy + H, dx:dx + W, :] for dy in range(3) for dx in range(3)]
    xcol = jnp.concatenate(patches, axis=-1).reshape(B, HW, 9 * Cin)
    # TODO(synk): for production-size H*W / in_channels, replace the HBM im2col
    # (9x activation-read expansion) with a halo'd row tile of the padded NHWC
    # input assembled in-kernel.

    kparams = (params["k_w1col"], params["k_o1"],
               params["k_w2cat"], params["k_o2cat"],
               params["k_w3big"], params["k_b3big"], params["k_gsum"])
    weight_bytes = sum(int(a.size) * a.dtype.itemsize for a in kparams)
    cost = pl.CostEstimate(
        flops=2 * B * HW * (9 * Cin * Ci + 4 * Ci * Ci + 4 * Ci * 128 + 128 * 128),
        transcendentals=B * HW * 128,
        bytes_accessed=int(xcol.size) * 2 + B * HW * 128 * 4 + weight_bytes)

    const = lambda b, m: (0, 0)
    out = pl.pallas_call(
        _dbhead_categorize_kernel,
        out_shape=jax.ShapeDtypeStruct((B, HW, 128), jnp.float32),
        grid_spec=pltpu.PrefetchScalarGridSpec(
            num_scalar_prefetch=0,
            grid=(B, HW // TM),
            in_specs=[
                pl.BlockSpec((1, TM, 9 * Cin), lambda b, m: (b, m, 0)),
                pl.BlockSpec((9 * Cin, Ci), const),
                pl.BlockSpec((1, Ci), const),
                pl.BlockSpec((Ci, 4 * Ci), const),
                pl.BlockSpec((1, 4 * Ci), const),
                pl.BlockSpec((4 * Ci, 128), const),
                pl.BlockSpec((1, 128), const),
                pl.BlockSpec((128, 128), const),
            ],
            out_specs=pl.BlockSpec((1, TM, 128), lambda b, m: (b, m, 0)),
        ),
        compiler_params=pltpu.CompilerParams(
            dimension_semantics=("parallel", "parallel"),
            vmem_limit_bytes=32 * 1024 * 1024),
        cost_estimate=cost,
    )(xcol, *kparams)

    # Layout glue: lane-dense slab -> depth-to-space -> NCHW (B, 8, 4H, 4W).
    out = out.reshape(B, H, W, 4, 4, 8)            # (..., p, q, c); lane = p*32+q*8+c
    out = jnp.transpose(out, (0, 5, 1, 3, 2, 4))   # (B, c, H, p, W, q)
    return out.reshape(B, 8, 4 * H, 4 * W)


def init_params(key, in_channels):
    """Deterministic synthetic parameters (shapes from DBHead._init_categorize,
    eval-mode BatchNorm folded to per-channel scale/offset)."""
    Cin = in_channels
    Ci = int(in_channels * 1.0)
    ks = jax.random.split(key, 12)
    eps = 1e-5

    def q(w):  # conv weights live in bf16 (kernel dtype); keep exact f32 copy for ref
        return w.astype(jnp.bfloat16).astype(jnp.float32)

    # Conv2d(Cin, Ci, 3, pad=1, bias=False): stored as (9, Cin, Ci) per (dy, dx).
    w1 = q(jax.random.normal(ks[0], (9, Cin, Ci), jnp.float32) * 0.3)
    g1 = 1.0 + 0.1 * jax.random.normal(ks[1], (Ci,), jnp.float32)
    be1 = 0.1 * jax.random.normal(ks[2], (Ci,), jnp.float32)
    rm1 = 0.1 * jax.random.normal(ks[3], (Ci,), jnp.float32)
    rv1 = 0.5 + 0.5 * jnp.abs(jax.random.normal(ks[4], (Ci,), jnp.float32))
    s1 = g1 / jnp.sqrt(rv1 + eps)
    o1 = be1 - rm1 * s1

    # ConvTranspose2d(Ci, Ci, 2, 2): weight (Ci_in, Ci_out, 2, 2) stored as (4, Ci, Ci).
    w2 = q(jax.random.normal(ks[5], (4, Ci, Ci), jnp.float32) * 0.3)
    b2 = 0.1 * jax.random.normal(ks[6], (Ci,), jnp.float32)
    g2 = 1.0 + 0.1 * jax.random.normal(ks[7], (Ci,), jnp.float32)
    be2 = 0.1 * jax.random.normal(ks[8], (Ci,), jnp.float32)
    rm2 = 0.1 * jax.random.normal(ks[9], (Ci,), jnp.float32)
    rv2 = 0.5 + 0.5 * jnp.abs(jax.random.normal(ks[10], (Ci,), jnp.float32))
    s2 = g2 / jnp.sqrt(rv2 + eps)
    o2 = be2 - rm2 * s2

    # ConvTranspose2d(Ci, 8, 2, 2): stored as (4, Ci, 8).
    w3 = q(jax.random.normal(ks[11], (4, Ci, 8), jnp.float32) * 0.3)
    b3 = 0.1 * jnp.arange(8, dtype=jnp.float32) - 0.35

    params = dict(w1=w1, s1=s1, o1=o1, w2=w2, b2=b2, s2=s2, o2=o2, w3=w3, b3=b3)
    params.update(_prepare_kernel_params(params, Cin, Ci))
    return params


def ref_forward(x_nchw, p):
    """Plain-JAX f32 reference (different assembly path) for verification."""
    B, Cin, H, W = x_nchw.shape
    Ci = p["s1"].shape[0]
    x = jnp.transpose(x_nchw, (0, 2, 3, 1)).astype(jnp.float32)
    xp = jnp.pad(x, ((0, 0), (1, 1), (1, 1), (0, 0)))

    y = jnp.zeros((B, H, W, Ci), jnp.float32)
    for dy in range(3):
        for dx in range(3):
            y = y + jnp.einsum("bhwc,cd->bhwd",
                               xp[:, dy:dy + H, dx:dx + W, :], p["w1"][dy * 3 + dx])
    y = jnp.maximum(y * p["s1"] + p["o1"], 0.0)

    z = jnp.zeros((B, 2 * H, 2 * W, Ci), jnp.float32)
    for di in range(2):
        for dj in range(2):
            v = jnp.einsum("bhwc,cd->bhwd", y, p["w2"][di * 2 + dj]) + p["b2"]
            z = z.at[:, di::2, dj::2, :].set(v)
    z = jnp.maximum(z * p["s2"] + p["o2"], 0.0)

    o = jnp.zeros((B, 4 * H, 4 * W, 8), jnp.float32)
    for ei in range(2):
        for ej in range(2):
            v = jnp.einsum("bhwc,cd->bhwd", z, p["w3"][ei * 2 + ej]) + p["b3"]
            o = o.at[:, ei::2, ej::2, :].set(v)
    o = jax.nn.softmax(o, axis=-1)
    return jnp.transpose(o, (0, 3, 1, 2))


if __name__ == "__main__":
    key = jax.random.PRNGKey(0)
    kx, kp = jax.random.split(key)
    B, Cin, H, W = 2, 4, 16, 16                 # x: (batch, in_channels, h, w)
    x = jax.random.normal(kx, (B, Cin, H, W), jnp.float32)
    params = init_params(kp, Cin)

    fwd = jax.jit(dbhead_test_forward)
    out = jax.block_until_ready(fwd(x, params))
    ref = jax.block_until_ready(ref_forward(x, params))

    assert out.shape == (B, 8, 4 * H, 4 * W), out.shape
    err = jnp.abs(out - ref)
    max_err = float(jnp.max(err))
    mean_err = float(jnp.mean(err))
    # Kernel runs bf16 inputs/weights on the MXU (f32 accumulation); the reference is
    # pure f32, so tolerances are bf16-level rather than the 1e-4 of an all-f32 path.
    assert max_err < 5e-2 and mean_err < 5e-3, (max_err, mean_err)
    # Channel softmax must sum to 1 at every output pixel.
    assert jnp.allclose(jnp.sum(out, axis=1), 1.0, atol=5e-3)
    print("KERNEL_OK")
</pallas_src>

<mosaic_0001>
module attributes {stable_mosaic.version = 11 : i64} {
  func.func @_dbhead_categorize_kernel(%arg0: i32, %arg1: i32, %arg2: memref<1x256x36xbf16, #tpu.memory_space<vmem>>, %arg3: memref<36x4xbf16, #tpu.memory_space<vmem>>, %arg4: memref<1x4xf32, #tpu.memory_space<vmem>>, %arg5: memref<4x16xbf16, #tpu.memory_space<vmem>>, %arg6: memref<1x16xf32, #tpu.memory_space<vmem>>, %arg7: memref<16x128xbf16, #tpu.memory_space<vmem>>, %arg8: memref<1x128xf32, #tpu.memory_space<vmem>>, %arg9: memref<128x128xf32, #tpu.memory_space<vmem>>, %arg10: memref<1x256x128xf32, #tpu.memory_space<vmem>>) attributes {dimension_semantics = [#tpu.dimension_semantics<parallel>, #tpu.dimension_semantics<parallel>], iteration_bounds = array<i64: 2, 1>, scalar_prefetch = 0 : i64, scratch_operands = 0 : i64, tpu.core_type = #tpu.core_type<tc>, window_params = [{transform_indices = @transform_0, window_bounds = array<i64: 1, 256, 36>}, {pipeline_mode = #tpu.pipeline_mode<synchronous>, transform_indices = @transform_1, window_bounds = array<i64: 36, 4>}, {pipeline_mode = #tpu.pipeline_mode<synchronous>, transform_indices = @transform_2, window_bounds = array<i64: 1, 4>}, {pipeline_mode = #tpu.pipeline_mode<synchronous>, transform_indices = @transform_3, window_bounds = array<i64: 4, 16>}, {pipeline_mode = #tpu.pipeline_mode<synchronous>, transform_indices = @transform_4, window_bounds = array<i64: 1, 16>}, {pipeline_mode = #tpu.pipeline_mode<synchronous>, transform_indices = @transform_5, window_bounds = array<i64: 16, 128>}, {pipeline_mode = #tpu.pipeline_mode<synchronous>, transform_indices = @transform_6, window_bounds = array<i64: 1, 128>}, {pipeline_mode = #tpu.pipeline_mode<synchronous>, transform_indices = @transform_7, window_bounds = array<i64: 128, 128>}, {transform_indices = @transform_8, window_bounds = array<i64: 1, 256, 128>}]} {
    %c0 = arith.constant 0 : index
    %c0_0 = arith.constant 0 : index
    %c0_1 = arith.constant 0 : index
    %0 = vector.load %arg2[%c0, %c0_0, %c0_1] : memref<1x256x36xbf16, #tpu.memory_space<vmem>>, vector<1x256x36xbf16>
    %1 = vector.shape_cast %0 : vector<1x256x36xbf16> to vector<256x36xbf16>
    %c0_2 = arith.constant 0 : index
    %c0_3 = arith.constant 0 : index
    %2 = vector.load %arg3[%c0_2, %c0_3] : memref<36x4xbf16, #tpu.memory_space<vmem>>, vector<36x4xbf16>
    %cst = arith.constant dense<0.000000e+00> : vector<256x4xf32>
    %3 = tpu.matmul %1, %2, %cst {dimension_numbers = #tpu.dot_dimension_numbers<[1], [0], [0], [1], [0, 0, 1, 1], [], []>} : vector<256x36xbf16>, vector<36x4xbf16>, vector<256x4xf32> -> vector<256x4xf32>
    %c0_4 = arith.constant 0 : index
    %c0_5 = arith.constant 0 : index
    %4 = vector.load %arg4[%c0_4, %c0_5] : memref<1x4xf32, #tpu.memory_space<vmem>>, vector<1x4xf32>
    %5 = vector.broadcast %4 : vector<1x4xf32> to vector<256x4xf32>
    %6 = arith.addf %3, %5 : vector<256x4xf32>
    %cst_6 = arith.constant 0.000000e+00 : f32
    %7 = vector.broadcast %cst_6 : f32 to vector<256x4xf32>
    %8 = arith.maximumf %6, %7 : vector<256x4xf32>
    %9 = arith.truncf %8 : vector<256x4xf32> to vector<256x4xbf16>
    %c0_7 = arith.constant 0 : index
    %c0_8 = arith.constant 0 : index
    %10 = vector.load %arg5[%c0_7, %c0_8] : memref<4x16xbf16, #tpu.memory_space<vmem>>, vector<4x16xbf16>
    %cst_9 = arith.constant dense<0.000000e+00> : vector<256x16xf32>
    %11 = tpu.matmul %9, %10, %cst_9 {dimension_numbers = #tpu.dot_dimension_numbers<[1], [0], [0], [1], [0, 0, 1, 1], [], []>} : vector<256x4xbf16>, vector<4x16xbf16>, vector<256x16xf32> -> vector<256x16xf32>
    %c0_10 = arith.constant 0 : index
    %c0_11 = arith.constant 0 : index
    %12 = vector.load %arg6[%c0_10, %c0_11] : memref<1x16xf32, #tpu.memory_space<vmem>>, vector<1x16xf32>
    %13 = vector.broadcast %12 : vector<1x16xf32> to vector<256x16xf32>
    %14 = arith.addf %11, %13 : vector<256x16xf32>
    %cst_12 = arith.constant 0.000000e+00 : f32
    %15 = vector.broadcast %cst_12 : f32 to vector<256x16xf32>
    %16 = arith.maximumf %14, %15 : vector<256x16xf32>
    %17 = arith.truncf %16 : vector<256x16xf32> to vector<256x16xbf16>
    %c0_13 = arith.constant 0 : index
    %c0_14 = arith.constant 0 : index
    %18 = vector.load %arg7[%c0_13, %c0_14] : memref<16x128xbf16, #tpu.memory_space<vmem>>, vector<16x128xbf16>
    %cst_15 = arith.constant dense<0.000000e+00> : vector<256x128xf32>
    %19 = tpu.matmul %17, %18, %cst_15 {dimension_numbers = #tpu.dot_dimension_numbers<[1], [0], [0], [1], [0, 0, 1, 1], [], []>} : vector<256x16xbf16>, vector<16x128xbf16>, vector<256x128xf32> -> vector<256x128xf32>
    %c0_16 = arith.constant 0 : index
    %c0_17 = arith.constant 0 : index
    %20 = vector.load %arg8[%c0_16, %c0_17] : memref<1x128xf32, #tpu.memory_space<vmem>>, vector<1x128xf32>
    %21 = vector.broadcast %20 : vector<1x128xf32> to vector<256x128xf32>
    %22 = arith.addf %19, %21 : vector<256x128xf32>
    %cst_18 = arith.constant dense<0xFF800000> : vector<256xf32>
    %23 = vector.multi_reduction <maximumf>, %22, %cst_18 [1] : vector<256x128xf32> to vector<256xf32>
    %24 = vector.shape_cast %23 : vector<256xf32> to vector<256x1xf32>
    %25 = vector.broadcast %24 : vector<256x1xf32> to vector<256x128xf32>
    %26 = arith.subf %22, %25 : vector<256x128xf32>
    %27 = math.exp %26 : vector<256x128xf32>
    %c0_19 = arith.constant 0 : index
    %c0_20 = arith.constant 0 : index
    %28 = vector.load %arg9[%c0_19, %c0_20] : memref<128x128xf32, #tpu.memory_space<vmem>>, vector<128x128xf32>
    %cst_21 = arith.constant dense<0.000000e+00> : vector<256x128xf32>
    %29 = tpu.matmul %27, %28, %cst_21 {dimension_numbers = #tpu.dot_dimension_numbers<[1], [0], [0], [1], [0, 0, 1, 1], [], []>} : vector<256x128xf32>, vector<128x128xf32>, vector<256x128xf32> -> vector<256x128xf32>
    %30 = tpu.reciprocal %29 {approx = true} : vector<256x128xf32> -> vector<256x128xf32>
    %31 = arith.mulf %27, %30 : vector<256x128xf32>
    %c0_22 = arith.constant 0 : index
    %c0_23 = arith.constant 0 : index
    %c0_24 = arith.constant 0 : index
    %32 = vector.load %arg10[%c0_22, %c0_23, %c0_24] : memref<1x256x128xf32, #tpu.memory_space<vmem>>, vector<1x256x128xf32>
    %33 = vector.shape_cast %32 : vector<1x256x128xf32> to vector<256x128xf32>
    %34 = vector.shape_cast %31 : vector<256x128xf32> to vector<1x256x128xf32>
    tpu.vector_store %arg10[%c0_22, %c0_23, %c0_24], %34 {strides = array<i32>} : memref<1x256x128xf32, #tpu.memory_space<vmem>>, vector<1x256x128xf32>,
    return
  }
  func.func @transform_0(%arg0: i32, %arg1: i32) -> (i32, i32, i32) {
    %c0_i32 = arith.constant 0 : i32
    %c0_i32_0 = arith.constant 0 : i32
    return %arg0, %arg1, %c0_i32 : i32, i32, i32
  }
  func.func @transform_1(%arg0: i32, %arg1: i32) -> (i32, i32) {
    %c0_i32 = arith.constant 0 : i32
    %c0_i32_0 = arith.constant 0 : i32
    %c0_i32_1 = arith.constant 0 : i32
    return %c0_i32, %c0_i32_0 : i32, i32
  }
  func.func @transform_2(%arg0: i32, %arg1: i32) -> (i32, i32) {
    %c0_i32 = arith.constant 0 : i32
    %c0_i32_0 = arith.constant 0 : i32
    %c0_i32_1 = arith.constant 0 : i32
    return %c0_i32, %c0_i32_0 : i32, i32
  }
  func.func @transform_3(%arg0: i32, %arg1: i32) -> (i32, i32) {
    %c0_i32 = arith.constant 0 : i32
    %c0_i32_0 = arith.constant 0 : i32
    %c0_i32_1 = arith.constant 0 : i32
    return %c0_i32, %c0_i32_0 : i32, i32
  }
  func.func @transform_4(%arg0: i32, %arg1: i32) -> (i32, i32) {
    %c0_i32 = arith.constant 0 : i32
    %c0_i32_0 = arith.constant 0 : i32
    %c0_i32_1 = arith.constant 0 : i32
    return %c0_i32, %c0_i32_0 : i32, i32
  }
  func.func @transform_5(%arg0: i32, %arg1: i32) -> (i32, i32) {
    %c0_i32 = arith.constant 0 : i32
    %c0_i32_0 = arith.constant 0 : i32
    %c0_i32_1 = arith.constant 0 : i32
    return %c0_i32, %c0_i32_0 : i32, i32
  }
  func.func @transform_6(%arg0: i32, %arg1: i32) -> (i32, i32) {
    %c0_i32 = arith.constant 0 : i32
    %c0_i32_0 = arith.constant 0 : i32
    %c0_i32_1 = arith.constant 0 : i32
    return %c0_i32, %c0_i32_0 : i32, i32
  }
  func.func @transform_7(%arg0: i32, %arg1: i32) -> (i32, i32) {
    %c0_i32 = arith.constant 0 : i32
    %c0_i32_0 = arith.constant 0 : i32
    %c0_i32_1 = arith.constant 0 : i32
    return %c0_i32, %c0_i32_0 : i32, i32
  }
  func.func @transform_8(%arg0: i32, %arg1: i32) -> (i32, i32, i32) {
    %c0_i32 = arith.constant 0 : i32
    %c0_i32_0 = arith.constant 0 : i32
    return %arg0, %arg1, %c0_i32 : i32, i32, i32
  }
}

</mosaic_0001>

<llo_original>
// kernel: dbhead_test_forward.1
$region0: #{dbhead_test_forward.1}
  #allocation0 [shape = 'u32[]', space=smem, size = 0x4, offset = 0x4, fixed_abs, tag = 'smem constant byte address 0x4 - core index']
  #allocation1 [shape = 'u32[144,128]{1,0:T(1,128)}', space=vmem, size = 0x12000, scoped, tag = 'internal scratch']
  %s0 = inlined_call_operand.vmem [shape: bf16[2,256,36], index: 0, kind: input, shape index: {}]
  %s1 = inlined_call_operand.vmem [shape: bf16[36,4], index: 1, kind: input, shape index: {}]
  %s2 = inlined_call_operand.hbm [shape: f32[1,4], index: 2, kind: input, shape index: {}]
  %s3 = inlined_call_operand.hbm [shape: bf16[4,16], index: 3, kind: input, shape index: {}]
  %s4 = inlined_call_operand.hbm [shape: f32[1,16], index: 4, kind: input, shape index: {}]
  %s5 = inlined_call_operand.hbm [shape: bf16[16,128], index: 5, kind: input, shape index: {}]
  %s6 = inlined_call_operand.hbm [shape: f32[1,128], index: 6, kind: input, shape index: {}]
  %s7 = inlined_call_operand.hbm [shape: f32[128,128], index: 7, kind: input, shape index: {}]
  %s8 = inlined_call_operand.vmem [shape: f32[2,256,128], index: 8, kind: output, shape index: {}]
  %s9 = sld [smem:[#allocation0]]
  $region89: #{dbhead_test_forward.1} parent=0
    _
  %s11 = ssub.s32 1, %s9
  %s12 = scalar_select 0, %s11, %s9
  $region1: #{dbhead_test_forward.1} parent=0
    #allocation2 [shape = 'u8[512]{0}', space=vmem, size = 0x400, scoped, tag = 'input window, operand 2, single buffered']
    #allocation3 [shape = 's32[2]{0}', space=sflag, size = 0x8, scoped, tag = 'scoped memory for dbhead_test_forward.1']
    #allocation4 [shape = 'u8[1024]{0}', space=vmem, size = 0x400, scoped, tag = 'input window, operand 3, single buffered']
    #allocation5 [shape = 's32[1]{0}', space=sflag, size = 0x4, scoped, tag = 'scoped memory for dbhead_test_forward.1']
    #allocation6 [shape = 'u8[512]{0}', space=vmem, size = 0x400, scoped, tag = 'input window, operand 4, single buffered']
    #allocation7 [shape = 'u8[4096]{0}', space=vmem, size = 0x1000, scoped, tag = 'input window, operand 5, single buffered']
    #allocation8 [shape = 's32[1]{0}', space=sflag, size = 0x4, scoped, tag = 'scoped memory for dbhead_test_forward.1']
    #allocation9 [shape = 'u8[512]{0}', space=vmem, size = 0x400, scoped, tag = 'input window, operand 6, single buffered']
    #allocation10 [shape = 'u8[65536]{0}', space=vmem, size = 0x10000, scoped, tag = 'input window, operand 7, single buffered']
    #allocation11 [shape = 's32[1]{0}', space=sflag, size = 0x4, scoped, tag = 'scoped memory for dbhead_test_forward.1']
    %13 = vsyncpa [#allocation3], 0
    %14 = vsyncpa [#allocation5], 0
    %15 = vsyncpa [#allocation8], 0
    %16 = vsyncpa [#allocation11], 0
    loop: start=0, step=1, limit=4
    $region2: #{dbhead_test_forward.1} parent=1 // loop_pre_header
      _
    $region3: #{dbhead_test_forward.1} parent=1 // loop_header
      %s18 = sphi 0, %s22
      %p19 = scmp.ge.s32.totalorder %s18, 4
      %s25 = sphi 0, %s37
      %s26 = sphi 0, %s33
      %s27 = sphi 0, %s25
      %s28 = sphi 0, %s26
      %s29 = sphi 0, %s27
      %s30 = sphi 0, %s28
      %s42 = sphi 0, %s44
      %s45 = sphi 0, %s42
      %s46 = sphi 0, %s45
      %s62 = sphi 0, %s46
      %s66 = sphi 0, %s66
      %s68 = sphi 0, %s66
      %s69 = sphi 0, %s68
      %s83 = sphi 0, %s69
      %s87 = sphi 0, %s87
      %s89 = sphi 0, %s87
      %s90 = sphi 0, %s89
      %s104 = sphi 0, %s90
      %s108 = sphi 0, %s108
      %s110 = sphi 0, %s108
      %s111 = sphi 0, %s110
      %s125 = sphi 0, %s111
      %s129 = sphi 0, %s129
      %s131 = sphi 0, %s129
      %s132 = sphi 0, %s131
      %s146 = sphi 0, %s132
      %s150 = sphi 0, %s150
      %s152 = sphi 0, %s150
      %s153 = sphi 0, %s152
      %s167 = sphi 0, %s153
      %s171 = sphi 0, %s171
      %s173 = sphi 0, %s171
      %s174 = sphi 0, %s173
      %s188 = sphi 0, %s174
      %s192 = sphi 0, %s192
      %s194 = sphi 0, %s192
      %s195 = sphi 0, %s194
      %s209 = sphi 0, %s195
      %s217 = sphi 0, %s219
      %s220 = sphi 0, %s217
      %s221 = sphi 0, %s220
      %s237 = sphi 0, %s221
    $region4: #{dbhead_test_forward.1} parent=1 // loop_header_branch
      %21 = sbr.rel (%p19) target = $region8
    $region5: #{dbhead_test_forward.1} parent=1 // loop_body
      %s23 = ssub.s32 %s18, 1
      %s24 = ssub.s32 %s18, 2
      %s31 = sadd.s32 1, %s26
      %p32 = scmp.ge.s32.totalorder %s31, 1
      %s33 = scalar_select %p32, 0, %s31
      %s34 = sadd.s32 1, %s25
      %s35 = scalar_select %p32, %s34, %s25
      %p36 = scmp.ge.s32.totalorder %s35, 2
      %s37 = scalar_select %p36, 0, %s35
      %s38 = ssub.s32 %s25, %s37
      %s39 = ssub.s32 %s26, %s33
      %s40 = sor.u32 %s38, %s39
      %p41 = scmp.eq.s32.totalorder %s40, 0
      %s43 = sadd.s32 %s42, 1
      %s44 = scalar_select %p41, %s42, %s43
      %p47 = pneg %p41
      %p48 = scmp.eq.s32.totalorder %s18, 1
      %p49 = por %p47, %p48
      %p50 = scmp.ne.s32.totalorder %s42, %s45
      %p51 = scmp.eq.s32.totalorder %s18, 0
      %p52 = por %p50, %p51
      %p53 = scmp.ne.s32.totalorder %s42, %s45
      %p54 = scmp.eq.s32.totalorder %s23, 1
      %p55 = por %p53, %p54
      %p56 = scmp.ne.s32.totalorder %s45, %s46
      %p57 = scmp.eq.s32.totalorder %s23, 0
      %p58 = por %p56, %p57
      %p59 = scmp.ne.s32.totalorder %s45, %s46
      %p60 = scmp.eq.s32.totalorder %s24, 1
      %p61 = por %p59, %p60
      %p63 = scmp.ne.s32.totalorder %s46, %s62
      %p64 = scmp.eq.s32.totalorder %s24, 0
      %p65 = por %p63, %p64
      %s67 = sadd.s32 %s66, 1
      %p70 = scmp.eq.s32.totalorder %s18, 1
      %p71 = scmp.ne.s32.totalorder %s66, %s68
      %p72 = scmp.eq.s32.totalorder %s18, 0
      %p73 = por %p71, %p72
      %p74 = scmp.ne.s32.totalorder %s66, %s68
      %p75 = scmp.eq.s32.totalorder %s23, 1
      %p76 = por %p74, %p75
      %p77 = scmp.ne.s32.totalorder %s68, %s69
      %p78 = scmp.eq.s32.totalorder %s23, 0
      %p79 = por %p77, %p78
      %p80 = scmp.ne.s32.totalorder %s68, %s69
      %p81 = scmp.eq.s32.totalorder %s24, 1
      %p82 = por %p80, %p81
      %p84 = scmp.ne.s32.totalorder %s69, %s83
      %p85 = scmp.eq.s32.totalorder %s24, 0
      %p86 = por %p84, %p85
      %s88 = sadd.s32 %s87, 1
      %p91 = scmp.eq.s32.totalorder %s18, 1
      %p92 = scmp.ne.s32.totalorder %s87, %s89
      %p93 = scmp.eq.s32.totalorder %s18, 0
      %p94 = por %p92, %p93
      %p95 = scmp.ne.s32.totalorder %s87, %s89
      %p96 = scmp.eq.s32.totalorder %s23, 1
      %p97 = por %p95, %p96
      %p98 = scmp.ne.s32.totalorder %s89, %s90
      %p99 = scmp.eq.s32.totalorder %s23, 0
      %p100 = por %p98, %p99
      %p101 = scmp.ne.s32.totalorder %s89, %s90
      %p102 = scmp.eq.s32.totalorder %s24, 1
      %p103 = por %p101, %p102
      %p105 = scmp.ne.s32.totalorder %s90, %s104
      %p106 = scmp.eq.s32.totalorder %s24, 0
      %p107 = por %p105, %p106
      %s109 = sadd.s32 %s108, 1
      %p112 = scmp.eq.s32.totalorder %s18, 1
      %p113 = scmp.ne.s32.totalorder %s108, %s110
      %p114 = scmp.eq.s32.totalorder %s18, 0
      %p115 = por %p113, %p114
      %p116 = scmp.ne.s32.totalorder %s108, %s110
      %p117 = scmp.eq.s32.totalorder %s23, 1
      %p118 = por %p116, %p117
      %p119 = scmp.ne.s32.totalorder %s110, %s111
      %p120 = scmp.eq.s32.totalorder %s23, 0
      %p121 = por %p119, %p120
      %p122 = scmp.ne.s32.totalorder %s110, %s111
      %p123 = scmp.eq.s32.totalorder %s24, 1
      %p124 = por %p122, %p123
      %p126 = scmp.ne.s32.totalorder %s111, %s125
      %p127 = scmp.eq.s32.totalorder %s24, 0
      %p128 = por %p126, %p127
      %s130 = sadd.s32 %s129, 1
      %p133 = scmp.eq.s32.totalorder %s18, 1
      %p134 = scmp.ne.s32.totalorder %s129, %s131
      %p135 = scmp.eq.s32.totalorder %s18, 0
      %p136 = por %p134, %p135
      %p137 = scmp.ne.s32.totalorder %s129, %s131
      %p138 = scmp.eq.s32.totalorder %s23, 1
      %p139 = por %p137, %p138
      %p140 = scmp.ne.s32.totalorder %s131, %s132
      %p141 = scmp.eq.s32.totalorder %s23, 0
      %p142 = por %p140, %p141
      %p143 = scmp.ne.s32.totalorder %s131, %s132
      %p144 = scmp.eq.s32.totalorder %s24, 1
      %p145 = por %p143, %p144
      %p147 = scmp.ne.s32.totalorder %s132, %s146
      %p148 = scmp.eq.s32.totalorder %s24, 0
      %p149 = por %p147, %p148
      %s151 = sadd.s32 %s150, 1
      %p154 = scmp.eq.s32.totalorder %s18, 1
      %p155 = scmp.ne.s32.totalorder %s150, %s152
      %p156 = scmp.eq.s32.totalorder %s18, 0
      %p157 = por %p155, %p156
      %p158 = scmp.ne.s32.totalorder %s150, %s152
      %p159 = scmp.eq.s32.totalorder %s23, 1
      %p160 = por %p158, %p159
      %p161 = scmp.ne.s32.totalorder %s152, %s153
      %p162 = scmp.eq.s32.totalorder %s23, 0
      %p163 = por %p161, %p162
      %p164 = scmp.ne.s32.totalorder %s152, %s153
      %p165 = scmp.eq.s32.totalorder %s24, 1
      %p166 = por %p164, %p165
      %p168 = scmp.ne.s32.totalorder %s153, %s167
      %p169 = scmp.eq.s32.totalorder %s24, 0
      %p170 = por %p168, %p169
      %s172 = sadd.s32 %s171, 1
      %p175 = scmp.eq.s32.totalorder %s18, 1
      %p176 = scmp.ne.s32.totalorder %s171, %s173
      %p177 = scmp.eq.s32.totalorder %s18, 0
      %p178 = por %p176, %p177
      %p179 = scmp.ne.s32.totalorder %s171, %s173
      %p180 = scmp.eq.s32.totalorder %s23, 1
      %p181 = por %p179, %p180
      %p182 = scmp.ne.s32.totalorder %s173, %s174
      %p183 = scmp.eq.s32.totalorder %s23, 0
      %p184 = por %p182, %p183
      %p185 = scmp.ne.s32.totalorder %s173, %s174
      %p186 = scmp.eq.s32.totalorder %s24, 1
      %p187 = por %p185, %p186
      %p189 = scmp.ne.s32.totalorder %s174, %s188
      %p190 = scmp.eq.s32.totalorder %s24, 0
      %p191 = por %p189, %p190
      %s193 = sadd.s32 %s192, 1
      %p196 = scmp.eq.s32.totalorder %s18, 1
      %p197 = scmp.ne.s32.totalorder %s192, %s194
      %p198 = scmp.eq.s32.totalorder %s18, 0
      %p199 = por %p197, %p198
      %p200 = scmp.ne.s32.totalorder %s192, %s194
      %p201 = scmp.eq.s32.totalorder %s23, 1
      %p202 = por %p200, %p201
      %p203 = scmp.ne.s32.totalorder %s194, %s195
      %p204 = scmp.eq.s32.totalorder %s23, 0
      %p205 = por %p203, %p204
      %p206 = scmp.ne.s32.totalorder %s194, %s195
      %p207 = scmp.eq.s32.totalorder %s24, 1
      %p208 = por %p206, %p207
      %p210 = scmp.ne.s32.totalorder %s195, %s209
      %p211 = scmp.eq.s32.totalorder %s24, 0
      %p212 = por %p210, %p211
      %s213 = ssub.s32 %s25, %s37
      %s214 = ssub.s32 %s26, %s33
      %s215 = sor.u32 %s213, %s214
      %p216 = scmp.eq.s32.totalorder %s215, 0
      %s218 = sadd.s32 %s217, 1
      %s219 = scalar_select %p216, %s217, %s218
      %p222 = pneg %p216
      %p223 = scmp.eq.s32.totalorder %s18, 1
      %p224 = por %p222, %p223
      %p225 = scmp.ne.s32.totalorder %s217, %s220
      %p226 = scmp.eq.s32.totalorder %s18, 0
      %p227 = por %p225, %p226
      %p228 = scmp.ne.s32.totalorder %s217, %s220
      %p229 = scmp.eq.s32.totalorder %s23, 1
      %p230 = por %p228, %p229
      %p231 = scmp.ne.s32.totalorder %s220, %s221
      %p232 = scmp.eq.s32.totalorder %s23, 0
      %p233 = por %p231, %p232
      %p234 = scmp.ne.s32.totalorder %s220, %s221
      %p235 = scmp.eq.s32.totalorder %s24, 1
      %p236 = por %p234, %p235
      %p238 = scmp.ne.s32.totalorder %s221, %s237
      %p239 = scmp.eq.s32.totalorder %s24, 0
      %p240 = por %p238, %p239
      %p241 = scmp.le.s32.totalorder 1, %s18
      %p242 = scmp.lt.s32.totalorder %s18, 3
      %p243 = pnand %p241, %p242
      %p244 = pneg %p243
      // Predicated region
      $region9: #{dbhead_test_forward.1} parent=5 // pred_check
        _
      $region10: #{dbhead_test_forward.1} parent=5 // pred_check_branch
        %246 = sbr.rel (%p243) target = $region12
      $region11: #{dbhead_test_forward.1} parent=5 // pred_region
        %s247 = ssub.s32 %s18, 1
        // Predicated region
        $region13: #{dbhead_test_forward.1} parent=11 // pred_check
          %p248 = pneg %p79
        $region14: #{dbhead_test_forward.1} parent=11 // pred_check_branch
          %250 = sbr.rel (%p248) target = $region16
        $region15: #{dbhead_test_forward.1} parent=11 // pred_region
          _
        $region16: #{dbhead_test_forward.1} parent=11 // pred_fallthru
          _
        // Predicated region
        $region17: #{dbhead_test_forward.1} parent=11 // pred_check
          %p251 = pneg %p100
        $region18: #{dbhead_test_forward.1} parent=11 // pred_check_branch
          %253 = sbr.rel (%p251) target = $region20
        $region19: #{dbhead_test_forward.1} parent=11 // pred_region
          %s255 = ssub.s32 16, 16
          %256 = vsyncadd [#allocation3], %s255
          %s258 = sshll.u32 [#allocation2], 4
          %s259 = int_to_ptr.vmem [resolvable:$true] %s258
          %261 = dma.hbm_to_vmem [thread:$0]  %s2, 16, %s259, [#allocation3]
        $region20: #{dbhead_test_forward.1} parent=11 // pred_fallthru
          _
        // Predicated region
        $region21: #{dbhead_test_forward.1} parent=11 // pred_check
          %p262 = pneg %p121
        $region22: #{dbhead_test_forward.1} parent=11 // pred_check_branch
          %264 = sbr.rel (%p262) target = $region24
        $region23: #{dbhead_test_forward.1} parent=11 // pred_region
          %s266 = ssub.s32 32, 32
          %267 = vsyncadd [#allocation5], %s266
          %s269 = sshll.u32 [#allocation4], 4
          %s270 = int_to_ptr.vmem [resolvable:$true] %s269
          %272 = dma.hbm_to_vmem [thread:$0]  %s3, 32, %s270, [#allocation5]
        $region24: #{dbhead_test_forward.1} parent=11 // pred_fallthru
          _
        // Predicated region
        $region25: #{dbhead_test_forward.1} parent=11 // pred_check
          %p273 = pneg %p142
        $region26: #{dbhead_test_forward.1} parent=11 // pred_check_branch
          %275 = sbr.rel (%p273) target = $region28
        $region27: #{dbhead_test_forward.1} parent=11 // pred_region
          %s277 = ssub.s32 16, 16
          %278 = vsyncadd [#allocation5], %s277
          %s280 = sshll.u32 [#allocation6], 4
          %s281 = int_to_ptr.vmem [resolvable:$true] %s280
          %283 = dma.hbm_to_vmem [thread:$0]  %s4, 16, %s281, [#allocation5]
        $region28: #{dbhead_test_forward.1} parent=11 // pred_fallthru
          _
        // Predicated region
        $region29: #{dbhead_test_forward.1} parent=11 // pred_check
          %p284 = pneg %p163
        $region30: #{dbhead_test_forward.1} parent=11 // pred_check_branch
          %286 = sbr.rel (%p284) target = $region32
        $region31: #{dbhead_test_forward.1} parent=11 // pred_region
          %s288 = ssub.s32 128, 128
          %289 = vsyncadd [#allocation8], %s288
          %s290 = sshll.u32 [#allocation7], 4
          %s291 = int_to_ptr.vmem [resolvable:$true] %s290
          %296 = dma.hbm_to_vmem [thread:$0]  %s5, 128, %s291, [#allocation8], 64, 64, 4
        $region32: #{dbhead_test_forward.1} parent=11 // pred_fallthru
          _
        // Predicated region
        $region33: #{dbhead_test_forward.1} parent=11 // pred_check
          %p297 = pneg %p184
        $region34: #{dbhead_test_forward.1} parent=11 // pred_check_branch
          %299 = sbr.rel (%p297) target = $region36
        $region35: #{dbhead_test_forward.1} parent=11 // pred_region
          %s301 = ssub.s32 16, 16
          %302 = vsyncadd [#allocation8], %s301
          %s304 = sshll.u32 [#allocation9], 4
          %s305 = int_to_ptr.vmem [resolvable:$true] %s304
          %307 = dma.hbm_to_vmem [thread:$0]  %s6, 16, %s305, [#allocation8]
        $region36: #{dbhead_test_forward.1} parent=11 // pred_fallthru
          _
        // Predicated region
        $region37: #{dbhead_test_forward.1} parent=11 // pred_check
          %p308 = pneg %p205
        $region38: #{dbhead_test_forward.1} parent=11 // pred_check_branch
          %310 = sbr.rel (%p308) target = $region40
        $region39: #{dbhead_test_forward.1} parent=11 // pred_region
          %s312 = ssub.s32 2048, 2048
          %313 = vsyncadd [#allocation11], %s312
          %s314 = sshll.u32 [#allocation10], 4
          %s315 = int_to_ptr.vmem [resolvable:$true] %s314
          %320 = dma.hbm_to_vmem [thread:$0]  %s7, 2048, %s315, [#allocation11], 128, 128, 8
        $region40: #{dbhead_test_forward.1} parent=11 // pred_fallthru
          _
      $region12: #{dbhead_test_forward.1} parent=5 // pred_fallthru
        _
      %p321 = scmp.lt.s32.totalorder %s18, 2
      // Predicated region
      $region41: #{dbhead_test_forward.1} parent=5 // pred_check
        %p322 = pneg %p321
      $region42: #{dbhead_test_forward.1} parent=5 // pred_check_branch
        %324 = sbr.rel (%p322) target = $region44
      $region43: #{dbhead_test_forward.1} parent=5 // pred_region
        // Predicated region
        $region45: #{dbhead_test_forward.1} parent=43 // pred_check
          %p325 = pneg %p52
        $region46: #{dbhead_test_forward.1} parent=43 // pred_check_branch
          %327 = sbr.rel (%p325) target = $region48
        $region47: #{dbhead_test_forward.1} parent=43 // pred_region
          %s328 = smul.u32 32, %s26
          %p329 = scmp.lt.s32.totalorder %s25, 1
          %s330 = scalar_select %p329, %s25, 1
          %p331 = scmp.lt.s32.totalorder %s328, 31
          %s332 = scalar_select %p331, %s328, 31
          %s333 = smul.addr %s330, 32
          %s334 = sadd.s32 %s332, %s333
          %s335 = smul.addr %s334, 4
          %s336 = scalar_lea.vmem %s0, %s335
          %s337 = smul.u32 32, %s26
        $region48: #{dbhead_test_forward.1} parent=43 // pred_fallthru
          _
      $region44: #{dbhead_test_forward.1} parent=5 // pred_fallthru
        _
      %p338 = scmp.le.s32.totalorder 1, %s18
      %p339 = scmp.lt.s32.totalorder %s18, 3
      %p340 = pnand %p338, %p339
      %p341 = pneg %p340
      // Predicated region
      $region49: #{dbhead_test_forward.1} parent=5 // pred_check
        _
      $region50: #{dbhead_test_forward.1} parent=5 // pred_check_branch
        %343 = sbr.rel (%p340) target = $region52
      $region51: #{dbhead_test_forward.1} parent=5 // pred_region
        %s344 = ssub.s32 %s18, 1
        // Predicated region
        $region53: #{dbhead_test_forward.1} parent=51 // pred_check
          %p345 = pneg %p100
        $region54: #{dbhead_test_forward.1} parent=51 // pred_check_branch
          %347 = sbr.rel (%p345) target = $region56
        $region55: #{dbhead_test_forward.1} parent=51 // pred_region
          %348 = dma.done [#allocation3], 16
        $region56: #{dbhead_test_forward.1} parent=51 // pred_fallthru
          _
        // Predicated region
        $region57: #{dbhead_test_forward.1} parent=51 // pred_check
          %p349 = pneg %p121
        $region58: #{dbhead_test_forward.1} parent=51 // pred_check_branch
          %351 = sbr.rel (%p349) target = $region60
        $region59: #{dbhead_test_forward.1} parent=51 // pred_region
          %352 = dma.done [#allocation5], 32
        $region60: #{dbhead_test_forward.1} parent=51 // pred_fallthru
          _
        // Predicated region
        $region61: #{dbhead_test_forward.1} parent=51 // pred_check
          %p353 = pneg %p142
        $region62: #{dbhead_test_forward.1} parent=51 // pred_check_branch
          %355 = sbr.rel (%p353) target = $region64
        $region63: #{dbhead_test_forward.1} parent=51 // pred_region
          %356 = dma.done [#allocation5], 16
        $region64: #{dbhead_test_forward.1} parent=51 // pred_fallthru
          _
        // Predicated region
        $region65: #{dbhead_test_forward.1} parent=51 // pred_check
          %p357 = pneg %p163
        $region66: #{dbhead_test_forward.1} parent=51 // pred_check_branch
          %359 = sbr.rel (%p357) target = $region68
        $region67: #{dbhead_test_forward.1} parent=51 // pred_region
          %360 = dma.done [#allocation8], 128
        $region68: #{dbhead_test_forward.1} parent=51 // pred_fallthru
          _
        // Predicated region
        $region69: #{dbhead_test_forward.1} parent=51 // pred_check
          %p361 = pneg %p184
        $region70: #{dbhead_test_forward.1} parent=51 // pred_check_branch
          %363 = sbr.rel (%p361) target = $region72
        $region71: #{dbhead_test_forward.1} parent=51 // pred_region
          %364 = dma.done [#allocation8], 16
        $region72: #{dbhead_test_forward.1} parent=51 // pred_fallthru
          _
        // Predicated region
        $region73: #{dbhead_test_forward.1} parent=51 // pred_check
          %p365 = pneg %p205
        $region74: #{dbhead_test_forward.1} parent=51 // pred_check_branch
          %367 = sbr.rel (%p365) target = $region76
        $region75: #{dbhead_test_forward.1} parent=51 // pred_region
          %368 = dma.done [#allocation11], 2048
        $region76: #{dbhead_test_forward.1} parent=51 // pred_fallthru
          _
        %s369 = smul.u32 32, %s28
        %p370 = scmp.lt.s32.totalorder %s27, 1
        %s371 = scalar_select %p370, %s27, 1
        %p372 = scmp.lt.s32.totalorder %s369, 31
        %s373 = scalar_select %p372, %s369, 31
        %s374 = smul.addr %s371, 32
        %s375 = sadd.s32 %s373, %s374
        %s376 = smul.addr %s375, 4
        %s377 = scalar_lea.vmem %s0, %s376
        %p378 = pneg %p58
        %p379 = pneg %p55
        %p380 = pneg %p79
        %p381 = pneg %p76
        %p382 = pneg %p100
        %p383 = pneg %p97
        %p384 = pneg %p121
        %p385 = pneg %p118
        %p386 = pneg %p142
        %p387 = pneg %p139
        %p388 = pneg %p163
        %p389 = pneg %p160
        %p390 = pneg %p184
        %p391 = pneg %p181
        %p392 = pneg %p205
        %p393 = pneg %p202
        %p394 = pneg %p233
        %p395 = pneg %p230
        %s396 = smul.u32 32, %s28
        %p397 = scmp.lt.s32.totalorder %s27, 1
        %s398 = scalar_select %p397, %s27, 1
        %p399 = scmp.lt.s32.totalorder %s396, 31
        %s400 = scalar_select %p399, %s396, 31
        %s401 = smul.addr %s398, 32
        %s402 = sadd.s32 %s400, %s401
        %s403 = smul.addr %s402, 8
        %s404 = scalar_lea.vmem %s8, %s403
        %s405 = smul.u32 32, %s28
        %p406 = scmp.lt.s32.totalorder %s27, 1
        %s407 = scalar_select %p406, %s27, 1
        %p408 = scmp.lt.s32.totalorder %s405, 31
        %s409 = scalar_select %p408, %s405, 31
        %s410 = smul.addr %s407, 32
        %s411 = sadd.s32 %s409, %s410
        %s412 = smul.addr %s411, 4
        %s413 = scalar_lea.vmem %s0, %s412
        %s414 = smul.u32 32, %s28
        %s415 = smul.u32 32, %s28
        %p416 = scmp.lt.s32.totalorder %s27, 1
        %s417 = scalar_select %p416, %s27, 1
        %p418 = scmp.lt.s32.totalorder %s415, 31
        %s419 = scalar_select %p418, %s415, 31
        %s420 = smul.addr %s417, 32
        %s421 = sadd.s32 %s419, %s420
        %s422 = smul.addr %s421, 8
        %s423 = scalar_lea.vmem %s8, %s422
        %s424 = smul.u32 32, %s28
        %v426 = vld [vmem:[%s413] sm:$0xf]
        %v427 = vld [vmem:[%s413 + $0x4] sm:$0xf]
        %v428 = vld [vmem:[%s413 + $0x8] sm:$0xf]
        %v429 = vld [vmem:[%s413 + $0xc] sm:$0xf]
        %v430 = vld [vmem:[%s413 + $0x10] sm:$0xf]
        %v431 = vld [vmem:[%s413 + $0x14] sm:$0xf]
        %v432 = vld [vmem:[%s413 + $0x18] sm:$0xf]
        %v433 = vld [vmem:[%s413 + $0x1c] sm:$0xf]
        %v434 = vld [vmem:[%s413 + $0x20] sm:$0xf]
        %v435 = vld [vmem:[%s413 + $0x24] sm:$0xf]
        %v436 = vld [vmem:[%s413 + $0x28] sm:$0xf]
        %v437 = vld [vmem:[%s413 + $0x2c] sm:$0xf]
        %v438 = vld [vmem:[%s413 + $0x30] sm:$0xf]
        %v439 = vld [vmem:[%s413 + $0x34] sm:$0xf]
        %v440 = vld [vmem:[%s413 + $0x38] sm:$0xf]
        %v441 = vld [vmem:[%s413 + $0x3c] sm:$0xf]
        %v442 = vld [vmem:[%s413 + $0x40] sm:$0xf]
        %v443 = vld [vmem:[%s413 + $0x44] sm:$0xf]
        %v444 = vld [vmem:[%s413 + $0x48] sm:$0xf]
        %v445 = vld [vmem:[%s413 + $0x4c] sm:$0xf]
        %v446 = vld [vmem:[%s413 + $0x50] sm:$0xf]
        %v447 = vld [vmem:[%s413 + $0x54] sm:$0xf]
        %v448 = vld [vmem:[%s413 + $0x58] sm:$0xf]
        %v449 = vld [vmem:[%s413 + $0x5c] sm:$0xf]
        %v450 = vld [vmem:[%s413 + $0x60] sm:$0xf]
        %v451 = vld [vmem:[%s413 + $0x64] sm:$0xf]
        %v452 = vld [vmem:[%s413 + $0x68] sm:$0xf]
        %v453 = vld [vmem:[%s413 + $0x6c] sm:$0xf]
        %v454 = vld [vmem:[%s413 + $0x70] sm:$0xf]
        %v455 = vld [vmem:[%s413 + $0x74] sm:$0xf]
        %v456 = vld [vmem:[%s413 + $0x78] sm:$0xf]
        %v457 = vld [vmem:[%s413 + $0x7c] sm:$0xf]
        %v458 = vld [vmem:[%s1] sm:$0xf]
        %v459 = vld [vmem:[%s1 + $0x4] sm:$0xf]
        %v460 = vld [vmem:[%s1 + $0x8] sm:$0xf]
        %v461 = vld [vmem:[%s1 + $0xc] sm:$0xf]
        %v462 = vld [vmem:[%s1 + $0x10] sm:$0x3]
        %v463 = vld [vmem:[#allocation2] sm:$0x1]
        %v465 = vlaneseq
        %v466 = vshrl.u32 %v465, 7
        %v467 = vsub.s32 0, %v466
        %v468 = vrot.slane %v463, %v467
        %v502 = vunpack.c.l.b16 %v426
        %v503 = vunpack.c.l.b16 %v427
        %v504 = vunpack.c.l.b16 %v428
        %v505 = vunpack.c.l.b16 %v429
        %v506 = vunpack.c.l.b16 %v430
        %v507 = vunpack.c.l.b16 %v431
        %v508 = vunpack.c.l.b16 %v432
        %v509 = vunpack.c.l.b16 %v433
        %v510 = vunpack.c.l.b16 %v434
        %v511 = vunpack.c.l.b16 %v435
        %v512 = vunpack.c.l.b16 %v436
        %v513 = vunpack.c.l.b16 %v437
        %v514 = vunpack.c.l.b16 %v438
        %v515 = vunpack.c.l.b16 %v439
        %v516 = vunpack.c.l.b16 %v440
        %v517 = vunpack.c.l.b16 %v441
        %v518 = vunpack.c.l.b16 %v442
        %v519 = vunpack.c.l.b16 %v443
        %v520 = vunpack.c.l.b16 %v444
        %v521 = vunpack.c.l.b16 %v445
        %v522 = vunpack.c.l.b16 %v446
        %v523 = vunpack.c.l.b16 %v447
        %v524 = vunpack.c.l.b16 %v448
        %v525 = vunpack.c.l.b16 %v449
        %v526 = vunpack.c.l.b16 %v450
        %v527 = vunpack.c.l.b16 %v451
        %v528 = vunpack.c.l.b16 %v452
        %v529 = vunpack.c.l.b16 %v453
        %v530 = vunpack.c.l.b16 %v454
        %v531 = vunpack.c.l.b16 %v455
        %v532 = vunpack.c.l.b16 %v456
        %v533 = vunpack.c.l.b16 %v457
        %v534 = vpack.c.b16 %v503, %v502
        %v535 = vpack.c.b16 %v505, %v504
        %v536 = vpack.c.b16 %v507, %v506
        %v537 = vpack.c.b16 %v509, %v508
        %v538 = vpack.c.b16 %v511, %v510
        %v539 = vpack.c.b16 %v513, %v512
        %v540 = vpack.c.b16 %v515, %v514
        %v541 = vpack.c.b16 %v517, %v516
        %v542 = vpack.c.b16 %v519, %v518
        %v543 = vpack.c.b16 %v521, %v520
        %v544 = vpack.c.b16 %v523, %v522
        %v545 = vpack.c.b16 %v525, %v524
        %v546 = vpack.c.b16 %v527, %v526
        %v547 = vpack.c.b16 %v529, %v528
        %v548 = vpack.c.b16 %v531, %v530
        %v549 = vpack.c.b16 %v533, %v532
        %v555 = vunpack.c.l.b16 %v458
        %v556 = vunpack.c.l.b16 %v459
        %v557 = vunpack.c.l.b16 %v460
        %v558 = vunpack.c.l.b16 %v461
        %v559 = vunpack.c.l.b16 %v462
        %v560 = vpack.c.b16 %v556, %v555
        %v561 = vpack.c.b16 %v558, %v557
        %v562 = vpack.c.b16 %v559, %v559
        %vm565 = vcmask 293888
        %v567 = vsel %vm565, %v534, 0
        %v570 = vsel %vm565, %v535, 0
        %v573 = vsel %vm565, %v536, 0
        %v576 = vsel %vm565, %v537, 0
        %v579 = vsel %vm565, %v538, 0
        %v582 = vsel %vm565, %v539, 0
        %v585 = vsel %vm565, %v540, 0
        %v588 = vsel %vm565, %v541, 0
        %v591 = vsel %vm565, %v542, 0
        %v594 = vsel %vm565, %v543, 0
        %v597 = vsel %vm565, %v544, 0
        %v600 = vsel %vm565, %v545, 0
        %v603 = vsel %vm565, %v546, 0
        %v606 = vsel %vm565, %v547, 0
        %v609 = vsel %vm565, %v548, 0
        %v612 = vsel %vm565, %v549, 0
        %vm614 = vcmask 1041408
        %v616 = vsel %vm614, %v562, 0
        %618 = vmatprep.subr.bf16.mxu0 0
        %619 = vmatpush1.bf16.msra.mxu0 0
        %620 = vmatprep.subr.bf16.mxu0 0
        %621 = vmatpush1.bf16.msra.mxu0 0
        %622 = vmatprep.subr.bf16.mxu0 0
        %623 = vmatpush1.bf16.msra.mxu0 0
        %624 = vmatprep.subr.bf16.mxu0 0
        %625 = vmatpush1.bf16.msra.mxu0 0
        %626 = vmatprep.subr.bf16.mxu0 0
        %627 = vmatpush1.bf16.msra.mxu0 0
        %628 = vmatprep.subr.bf16.mxu0 0
        %629 = vmatpush1.bf16.msra.mxu0 %v616
        %630 = vmatprep.subr.bf16.mxu0 0
        %631 = vmatpush1.bf16.msra.mxu0 %v561
        %632 = vmatprep.subr.bf16.mxu0 0
        %633 = vmatpush1.bf16.msra.mxu0 %v560
        %634 = vmatprep.subr.bf16.mxu0 0
        %635 = vmatpush2.bf16.msra.mxu0 0
        %636 = vmatprep.subr.bf16.mxu0 0
        %637 = vmatpush2.bf16.msra.mxu0 0
        %638 = vmatprep.subr.bf16.mxu0 0
        %639 = vmatpush2.bf16.msra.mxu0 0
        %640 = vmatprep.subr.bf16.mxu0 0
        %641 = vmatpush2.bf16.msra.mxu0 0
        %642 = vmatprep.subr.bf16.mxu0 0
        %643 = vmatpush2.bf16.msra.mxu0 0
        %644 = vmatprep.subr.bf16.mxu0 0
        %645 = vmatpush2.bf16.msra.mxu0 0
        %646 = vmatprep.subr.bf16.mxu0 0
        %647 = vmatpush2.bf16.msra.mxu0 0
        %648 = vmatprep.subr.bf16.mxu0 0
        %649 = vmatpush2.bf16.msra.mxu0 0
        %650 = vmatprep.mubr.bf16.mxu0 0
        %651 = vmatmul.mubr.bf16.gmra.mxu0 %v567
        %v652 = vpop.f32.mrf.mxu0
        %v653 = vadd.f32 %v468, %v652
        %v654 = vpop.f32.mrf.mxu0
        %v655 = vpop.f32.mrf.mxu0
        %v656 = vadd.f32 %v468, %v655
        %v657 = vpop.f32.mrf.mxu0
        %658 = vmatprep.mubr.bf16.mxu0 0
        %659 = vmatmul.mubr.bf16.gmra.mxu0 %v570
        %v660 = vpop.f32.mrf.mxu0
        %v661 = vadd.f32 %v468, %v660
        %v662 = vpop.f32.mrf.mxu0
        %v663 = vpop.f32.mrf.mxu0
        %v664 = vadd.f32 %v468, %v663
        %v665 = vpop.f32.mrf.mxu0
        %666 = vmatprep.mubr.bf16.mxu0 0
        %667 = vmatmul.mubr.bf16.gmra.mxu0 %v573
        %v668 = vpop.f32.mrf.mxu0
        %v669 = vadd.f32 %v468, %v668
        %v670 = vpop.f32.mrf.mxu0
        %v671 = vpop.f32.mrf.mxu0
        %v672 = vadd.f32 %v468, %v671
        %v673 = vpop.f32.mrf.mxu0
        %674 = vmatprep.mubr.bf16.mxu0 0
        %675 = vmatmul.mubr.bf16.gmra.mxu0 %v576
        %v676 = vpop.f32.mrf.mxu0
        %v677 = vadd.f32 %v468, %v676
        %v678 = vpop.f32.mrf.mxu0
        %v679 = vpop.f32.mrf.mxu0
        %v680 = vadd.f32 %v468, %v679
        %v681 = vpop.f32.mrf.mxu0
        %682 = vmatprep.mubr.bf16.mxu0 0
        %683 = vmatmul.mubr.bf16.gmra.mxu0 %v579
        %v684 = vpop.f32.mrf.mxu0
        %v685 = vadd.f32 %v468, %v684
        %v686 = vpop.f32.mrf.mxu0
        %v687 = vpop.f32.mrf.mxu0
        %v688 = vadd.f32 %v468, %v687
        %v689 = vpop.f32.mrf.mxu0
        %690 = vmatprep.mubr.bf16.mxu0 0
        %691 = vmatmul.mubr.bf16.gmra.mxu0 %v582
        %v692 = vpop.f32.mrf.mxu0
        %v693 = vadd.f32 %v468, %v692
        %v694 = vpop.f32.mrf.mxu0
        %v695 = vpop.f32.mrf.mxu0
        %v696 = vadd.f32 %v468, %v695
        %v697 = vpop.f32.mrf.mxu0
        %698 = vmatprep.mubr.bf16.mxu0 0
        %699 = vmatmul.mubr.bf16.gmra.mxu0 %v585
        %v700 = vpop.f32.mrf.mxu0
        %v701 = vadd.f32 %v468, %v700
        %v702 = vpop.f32.mrf.mxu0
        %v703 = vpop.f32.mrf.mxu0
        %v704 = vadd.f32 %v468, %v703
        %v705 = vpop.f32.mrf.mxu0
        %706 = vmatprep.mubr.bf16.mxu0 0
        %707 = vmatmul.mubr.bf16.gmra.mxu0 %v588
        %v708 = vpop.f32.mrf.mxu0
        %v709 = vadd.f32 %v468, %v708
        %v710 = vpop.f32.mrf.mxu0
        %v711 = vpop.f32.mrf.mxu0
        %v712 = vadd.f32 %v468, %v711
        %v713 = vpop.f32.mrf.mxu0
        %714 = vmatprep.mubr.bf16.mxu0 0
        %715 = vmatmul.mubr.bf16.gmra.mxu0 %v591
        %v716 = vpop.f32.mrf.mxu0
        %v717 = vadd.f32 %v468, %v716
        %v718 = vpop.f32.mrf.mxu0
        %v719 = vpop.f32.mrf.mxu0
        %v720 = vadd.f32 %v468, %v719
        %v721 = vpop.f32.mrf.mxu0
        %722 = vmatprep.mubr.bf16.mxu0 0
        %723 = vmatmul.mubr.bf16.gmra.mxu0 %v594
        %v724 = vpop.f32.mrf.mxu0
        %v725 = vadd.f32 %v468, %v724
        %v726 = vpop.f32.mrf.mxu0
        %v727 = vpop.f32.mrf.mxu0
        %v728 = vadd.f32 %v468, %v727
        %v729 = vpop.f32.mrf.mxu0
        %730 = vmatprep.mubr.bf16.mxu0 0
        %731 = vmatmul.mubr.bf16.gmra.mxu0 %v597
        %v732 = vpop.f32.mrf.mxu0
        %v733 = vadd.f32 %v468, %v732
        %v734 = vpop.f32.mrf.mxu0
        %v735 = vpop.f32.mrf.mxu0
        %v736 = vadd.f32 %v468, %v735
        %v737 = vpop.f32.mrf.mxu0
        %738 = vmatprep.mubr.bf16.mxu0 0
        %739 = vmatmul.mubr.bf16.gmra.mxu0 %v600
        %v740 = vpop.f32.mrf.mxu0
        %v741 = vadd.f32 %v468, %v740
        %v742 = vpop.f32.mrf.mxu0
        %v743 = vpop.f32.mrf.mxu0
        %v744 = vadd.f32 %v468, %v743
        %v745 = vpop.f32.mrf.mxu0
        %746 = vmatprep.mubr.bf16.mxu0 0
        %747 = vmatmul.mubr.bf16.gmra.mxu0 %v603
        %v748 = vpop.f32.mrf.mxu0
        %v749 = vadd.f32 %v468, %v748
        %v750 = vpop.f32.mrf.mxu0
        %v751 = vpop.f32.mrf.mxu0
        %v752 = vadd.f32 %v468, %v751
        %v753 = vpop.f32.mrf.mxu0
        %754 = vmatprep.mubr.bf16.mxu0 0
        %755 = vmatmul.mubr.bf16.gmra.mxu0 %v606
        %v756 = vpop.f32.mrf.mxu0
        %v757 = vadd.f32 %v468, %v756
        %v758 = vpop.f32.mrf.mxu0
        %v759 = vpop.f32.mrf.mxu0
        %v760 = vadd.f32 %v468, %v759
        %v761 = vpop.f32.mrf.mxu0
        %762 = vmatprep.mubr.bf16.mxu0 0
        %763 = vmatmul.mubr.bf16.gmra.mxu0 %v609
        %v764 = vpop.f32.mrf.mxu0
        %v765 = vadd.f32 %v468, %v764
        %v766 = vpop.f32.mrf.mxu0
        %v767 = vpop.f32.mrf.mxu0
        %v768 = vadd.f32 %v468, %v767
        %v769 = vpop.f32.mrf.mxu0
        %770 = vmatprep.mubr.bf16.mxu0 0
        %771 = vmatmul.mubr.bf16.gmra.mxu0 %v612
        %v772 = vpop.f32.mrf.mxu0
        %v773 = vadd.f32 %v468, %v772
        %v774 = vpop.f32.mrf.mxu0
        %v775 = vpop.f32.mrf.mxu0
        %v776 = vadd.f32 %v468, %v775
        %v777 = vpop.f32.mrf.mxu0
        %778 = vdwg.mxu0
        %v779 = vmax.f32 %v653, 0.0
        %v780 = vmax.f32 %v656, 0.0
        %v781 = vmax.f32 %v661, 0.0
        %v782 = vmax.f32 %v664, 0.0
        %v783 = vmax.f32 %v669, 0.0
        %v784 = vmax.f32 %v672, 0.0
        %v785 = vmax.f32 %v677, 0.0
        %v786 = vmax.f32 %v680, 0.0
        %v787 = vmax.f32 %v685, 0.0
        %v788 = vmax.f32 %v688, 0.0
        %v789 = vmax.f32 %v693, 0.0
        %v790 = vmax.f32 %v696, 0.0
        %v791 = vmax.f32 %v701, 0.0
        %v792 = vmax.f32 %v704, 0.0
        %v793 = vmax.f32 %v709, 0.0
        %v794 = vmax.f32 %v712, 0.0
        %v795 = vmax.f32 %v717, 0.0
        %v796 = vmax.f32 %v720, 0.0
        %v797 = vmax.f32 %v725, 0.0
        %v798 = vmax.f32 %v728, 0.0
        %v799 = vmax.f32 %v733, 0.0
        %v800 = vmax.f32 %v736, 0.0
        %v801 = vmax.f32 %v741, 0.0
        %v802 = vmax.f32 %v744, 0.0
        %v803 = vmax.f32 %v749, 0.0
        %v804 = vmax.f32 %v752, 0.0
        %v805 = vmax.f32 %v757, 0.0
        %v806 = vmax.f32 %v760, 0.0
        %v807 = vmax.f32 %v765, 0.0
        %v808 = vmax.f32 %v768, 0.0
        %v809 = vmax.f32 %v773, 0.0
        %v810 = vmax.f32 %v776, 0.0
        %v811 = vpack.c.bf16 %v780, %v779
        %v812 = vpack.c.bf16 %v782, %v781
        %v813 = vpack.c.bf16 %v784, %v783
        %v814 = vpack.c.bf16 %v786, %v785
        %v815 = vpack.c.bf16 %v788, %v787
        %v816 = vpack.c.bf16 %v790, %v789
        %v817 = vpack.c.bf16 %v792, %v791
        %v818 = vpack.c.bf16 %v794, %v793
        %v819 = vpack.c.bf16 %v796, %v795
        %v820 = vpack.c.bf16 %v798, %v797
        %v821 = vpack.c.bf16 %v800, %v799
        %v822 = vpack.c.bf16 %v802, %v801
        %v823 = vpack.c.bf16 %v804, %v803
        %v824 = vpack.c.bf16 %v806, %v805
        %v825 = vpack.c.bf16 %v808, %v807
        %v826 = vpack.c.bf16 %v810, %v809
        %v827 = vld [vmem:[#allocation4] sm:$0x3]
        %v828 = vld [vmem:[#allocation6] sm:$0x1]
        %v830 = vlaneseq
        %v831 = vshrl.u32 %v830, 7
        %v832 = vsub.s32 0, %v831
        %v833 = vrot.slane %v828, %v832
        %vm835 = vcmask 31744
        %v837 = vsel %vm835, %v811, 0
        %v840 = vsel %vm835, %v812, 0
        %v843 = vsel %vm835, %v813, 0
        %v846 = vsel %vm835, %v814, 0
        %v849 = vsel %vm835, %v815, 0
        %v852 = vsel %vm835, %v816, 0
        %v855 = vsel %vm835, %v817, 0
        %v858 = vsel %vm835, %v818, 0
        %v861 = vsel %vm835, %v819, 0
        %v864 = vsel %vm835, %v820, 0
        %v867 = vsel %vm835, %v821, 0
        %v870 = vsel %vm835, %v822, 0
        %v873 = vsel %vm835, %v823, 0
        %v876 = vsel %vm835, %v824, 0
        %v879 = vsel %vm835, %v825, 0
        %v882 = vsel %vm835, %v826, 0
        %v885 = vsel %vm614, %v827, 0
        %887 = vmatprep.subr.bf16.mxu0 0
        %888 = vmatpush1.bf16.msra.mxu0 0
        %889 = vmatprep.subr.bf16.mxu0 0
        %890 = vmatpush1.bf16.msra.mxu0 0
        %891 = vmatprep.subr.bf16.mxu0 0
        %892 = vmatpush1.bf16.msra.mxu0 0
        %893 = vmatprep.subr.bf16.mxu0 0
        %894 = vmatpush1.bf16.msra.mxu0 0
        %895 = vmatprep.subr.bf16.mxu0 0
        %896 = vmatpush1.bf16.msra.mxu0 0
        %897 = vmatprep.subr.bf16.mxu0 0
        %898 = vmatpush1.bf16.msra.mxu0 0
        %899 = vmatprep.subr.bf16.mxu0 0
        %900 = vmatpush1.bf16.msra.mxu0 0
        %901 = vmatprep.subr.bf16.mxu0 0
        %902 = vmatpush1.bf16.msra.mxu0 %v885
        %903 = vmatprep.subr.bf16.mxu0 0
        %904 = vmatpush2.bf16.msra.mxu0 0
        %905 = vmatprep.subr.bf16.mxu0 0
        %906 = vmatpush2.bf16.msra.mxu0 0
        %907 = vmatprep.subr.bf16.mxu0 0
        %908 = vmatpush2.bf16.msra.mxu0 0
        %909 = vmatprep.subr.bf16.mxu0 0
        %910 = vmatpush2.bf16.msra.mxu0 0
        %911 = vmatprep.subr.bf16.mxu0 0
        %912 = vmatpush2.bf16.msra.mxu0 0
        %913 = vmatprep.subr.bf16.mxu0 0
        %914 = vmatpush2.bf16.msra.mxu0 0
        %915 = vmatprep.subr.bf16.mxu0 0
        %916 = vmatpush2.bf16.msra.mxu0 0
        %917 = vmatprep.subr.bf16.mxu0 0
        %918 = vmatpush2.bf16.msra.mxu0 0
        %919 = vmatprep.mubr.bf16.mxu0 0
        %920 = vmatmul.mubr.bf16.gmra.mxu0 %v837
        %v921 = vpop.f32.mrf.mxu0
        %v922 = vadd.f32 %v833, %v921
        %v923 = vpop.f32.mrf.mxu0
        %v924 = vpop.f32.mrf.mxu0
        %v925 = vadd.f32 %v833, %v924
        %v926 = vpop.f32.mrf.mxu0
        %927 = vmatprep.mubr.bf16.mxu0 0
        %928 = vmatmul.mubr.bf16.gmra.mxu0 %v840
        %v929 = vpop.f32.mrf.mxu0
        %v930 = vadd.f32 %v833, %v929
        %v931 = vpop.f32.mrf.mxu0
        %v932 = vpop.f32.mrf.mxu0
        %v933 = vadd.f32 %v833, %v932
        %v934 = vpop.f32.mrf.mxu0
        %935 = vmatprep.mubr.bf16.mxu0 0
        %936 = vmatmul.mubr.bf16.gmra.mxu0 %v843
        %v937 = vpop.f32.mrf.mxu0
        %v938 = vadd.f32 %v833, %v937
        %v939 = vpop.f32.mrf.mxu0
        %v940 = vpop.f32.mrf.mxu0
        %v941 = vadd.f32 %v833, %v940
        %v942 = vpop.f32.mrf.mxu0
        %943 = vmatprep.mubr.bf16.mxu0 0
        %944 = vmatmul.mubr.bf16.gmra.mxu0 %v846
        %v945 = vpop.f32.mrf.mxu0
        %v946 = vadd.f32 %v833, %v945
        %v947 = vpop.f32.mrf.mxu0
        %v948 = vpop.f32.mrf.mxu0
        %v949 = vadd.f32 %v833, %v948
        %v950 = vpop.f32.mrf.mxu0
        %951 = vmatprep.mubr.bf16.mxu0 0
        %952 = vmatmul.mubr.bf16.gmra.mxu0 %v849
        %v953 = vpop.f32.mrf.mxu0
        %v954 = vadd.f32 %v833, %v953
        %v955 = vpop.f32.mrf.mxu0
        %v956 = vpop.f32.mrf.mxu0
        %v957 = vadd.f32 %v833, %v956
        %v958 = vpop.f32.mrf.mxu0
        %959 = vmatprep.mubr.bf16.mxu0 0
        %960 = vmatmul.mubr.bf16.gmra.mxu0 %v852
        %v961 = vpop.f32.mrf.mxu0
        %v962 = vadd.f32 %v833, %v961
        %v963 = vpop.f32.mrf.mxu0
        %v964 = vpop.f32.mrf.mxu0
        %v965 = vadd.f32 %v833, %v964
        %v966 = vpop.f32.mrf.mxu0
        %967 = vmatprep.mubr.bf16.mxu0 0
        %968 = vmatmul.mubr.bf16.gmra.mxu0 %v855
        %v969 = vpop.f32.mrf.mxu0
        %v970 = vadd.f32 %v833, %v969
        %v971 = vpop.f32.mrf.mxu0
        %v972 = vpop.f32.mrf.mxu0
        %v973 = vadd.f32 %v833, %v972
        %v974 = vpop.f32.mrf.mxu0
        %975 = vmatprep.mubr.bf16.mxu0 0
        %976 = vmatmul.mubr.bf16.gmra.mxu0 %v858
        %v977 = vpop.f32.mrf.mxu0
        %v978 = vadd.f32 %v833, %v977
        %v979 = vpop.f32.mrf.mxu0
        %v980 = vpop.f32.mrf.mxu0
        %v981 = vadd.f32 %v833, %v980
        %v982 = vpop.f32.mrf.mxu0
        %983 = vmatprep.mubr.bf16.mxu0 0
        %984 = vmatmul.mubr.bf16.gmra.mxu0 %v861
        %v985 = vpop.f32.mrf.mxu0
        %v986 = vadd.f32 %v833, %v985
        %v987 = vpop.f32.mrf.mxu0
        %v988 = vpop.f32.mrf.mxu0
        %v989 = vadd.f32 %v833, %v988
        %v990 = vpop.f32.mrf.mxu0
        %991 = vmatprep.mubr.bf16.mxu0 0
        %992 = vmatmul.mubr.bf16.gmra.mxu0 %v864
        %v993 = vpop.f32.mrf.mxu0
        %v994 = vadd.f32 %v833, %v993
        %v995 = vpop.f32.mrf.mxu0
        %v996 = vpop.f32.mrf.mxu0
        %v997 = vadd.f32 %v833, %v996
        %v998 = vpop.f32.mrf.mxu0
        %999 = vmatprep.mubr.bf16.mxu0 0
        %1000 = vmatmul.mubr.bf16.gmra.mxu0 %v867
        %v1001 = vpop.f32.mrf.mxu0
        %v1002 = vadd.f32 %v833, %v1001
        %v1003 = vpop.f32.mrf.mxu0
        %v1004 = vpop.f32.mrf.mxu0
        %v1005 = vadd.f32 %v833, %v1004
        %v1006 = vpop.f32.mrf.mxu0
        %1007 = vmatprep.mubr.bf16.mxu0 0
        %1008 = vmatmul.mubr.bf16.gmra.mxu0 %v870
        %v1009 = vpop.f32.mrf.mxu0
        %v1010 = vadd.f32 %v833, %v1009
        %v1011 = vpop.f32.mrf.mxu0
        %v1012 = vpop.f32.mrf.mxu0
        %v1013 = vadd.f32 %v833, %v1012
        %v1014 = vpop.f32.mrf.mxu0
        %1015 = vmatprep.mubr.bf16.mxu0 0
        %1016 = vmatmul.mubr.bf16.gmra.mxu0 %v873
        %v1017 = vpop.f32.mrf.mxu0
        %v1018 = vadd.f32 %v833, %v1017
        %v1019 = vpop.f32.mrf.mxu0
        %v1020 = vpop.f32.mrf.mxu0
        %v1021 = vadd.f32 %v833, %v1020
        %v1022 = vpop.f32.mrf.mxu0
        %1023 = vmatprep.mubr.bf16.mxu0 0
        %1024 = vmatmul.mubr.bf16.gmra.mxu0 %v876
        %v1025 = vpop.f32.mrf.mxu0
        %v1026 = vadd.f32 %v833, %v1025
        %v1027 = vpop.f32.mrf.mxu0
        %v1028 = vpop.f32.mrf.mxu0
        %v1029 = vadd.f32 %v833, %v1028
        %v1030 = vpop.f32.mrf.mxu0
        %1031 = vmatprep.mubr.bf16.mxu0 0
        %1032 = vmatmul.mubr.bf16.gmra.mxu0 %v879
        %v1033 = vpop.f32.mrf.mxu0
        %v1034 = vadd.f32 %v833, %v1033
        %v1035 = vpop.f32.mrf.mxu0
        %v1036 = vpop.f32.mrf.mxu0
        %v1037 = vadd.f32 %v833, %v1036
        %v1038 = vpop.f32.mrf.mxu0
        %1039 = vmatprep.mubr.bf16.mxu0 0
        %1040 = vmatmul.mubr.bf16.gmra.mxu0 %v882
        %v1041 = vpop.f32.mrf.mxu0
        %v1042 = vadd.f32 %v833, %v1041
        %v1043 = vpop.f32.mrf.mxu0
        %v1044 = vpop.f32.mrf.mxu0
        %v1045 = vadd.f32 %v833, %v1044
        %v1046 = vpop.f32.mrf.mxu0
        %1047 = vdwg.mxu0
        %v1048 = vmax.f32 %v922, 0.0
        %v1049 = vmax.f32 %v925, 0.0
        %v1050 = vmax.f32 %v930, 0.0
        %v1051 = vmax.f32 %v933, 0.0
        %v1052 = vmax.f32 %v938, 0.0
        %v1053 = vmax.f32 %v941, 0.0
        %v1054 = vmax.f32 %v946, 0.0
        %v1055 = vmax.f32 %v949, 0.0
        %v1056 = vmax.f32 %v954, 0.0
        %v1057 = vmax.f32 %v957, 0.0
        %v1058 = vmax.f32 %v962, 0.0
        %v1059 = vmax.f32 %v965, 0.0
        %v1060 = vmax.f32 %v970, 0.0
        %v1061 = vmax.f32 %v973, 0.0
        %v1062 = vmax.f32 %v978, 0.0
        %v1063 = vmax.f32 %v981, 0.0
        %v1064 = vmax.f32 %v986, 0.0
        %v1065 = vmax.f32 %v989, 0.0
        %v1066 = vmax.f32 %v994, 0.0
        %v1067 = vmax.f32 %v997, 0.0
        %v1068 = vmax.f32 %v1002, 0.0
        %v1069 = vmax.f32 %v1005, 0.0
        %v1070 = vmax.f32 %v1010, 0.0
        %v1071 = vmax.f32 %v1013, 0.0
        %v1072 = vmax.f32 %v1018, 0.0
        %v1073 = vmax.f32 %v1021, 0.0
        %v1074 = vmax.f32 %v1026, 0.0
        %v1075 = vmax.f32 %v1029, 0.0
        %v1076 = vmax.f32 %v1034, 0.0
        %v1077 = vmax.f32 %v1037, 0.0
        %v1078 = vmax.f32 %v1042, 0.0
        %v1079 = vmax.f32 %v1045, 0.0
        %v1080 = vpack.c.bf16 %v1049, %v1048
        %v1081 = vpack.c.bf16 %v1051, %v1050
        %v1082 = vpack.c.bf16 %v1053, %v1052
        %v1083 = vpack.c.bf16 %v1055, %v1054
        %v1084 = vpack.c.bf16 %v1057, %v1056
        %v1085 = vpack.c.bf16 %v1059, %v1058
        %v1086 = vpack.c.bf16 %v1061, %v1060
        %v1087 = vpack.c.bf16 %v1063, %v1062
        %v1088 = vpack.c.bf16 %v1065, %v1064
        %v1089 = vpack.c.bf16 %v1067, %v1066
        %v1090 = vpack.c.bf16 %v1069, %v1068
        %v1091 = vpack.c.bf16 %v1071, %v1070
        %v1092 = vpack.c.bf16 %v1073, %v1072
        %v1093 = vpack.c.bf16 %v1075, %v1074
        %v1094 = vpack.c.bf16 %v1077, %v1076
        %v1095 = vpack.c.bf16 %v1079, %v1078
        %v1096 = vld [vmem:[#allocation7] sm:$0xf]
        %v1097 = vld [vmem:[#allocation7 + $0x4] sm:$0xf]
        %v1098 = vld [vmem:[#allocation9] sm:$0x1]
        %v1100 = vlaneseq
        %v1101 = vshrl.u32 %v1100, 7
        %v1102 = vsub.s32 0, %v1101
        %v1103 = vrot.slane %v1098, %v1102
        %v1107 = vunpack.c.l.b16 %v1096
        %v1108 = vunpack.c.l.b16 %v1097
        %v1109 = vpack.c.b16 %v1108, %v1107
        %vm1111 = vcmask 130048
        %v1113 = vsel %vm1111, %v1080, 0
        %v1116 = vsel %vm1111, %v1081, 0
        %v1119 = vsel %vm1111, %v1082, 0
        %v1122 = vsel %vm1111, %v1083, 0
        %v1125 = vsel %vm1111, %v1084, 0
        %v1128 = vsel %vm1111, %v1085, 0
        %v1131 = vsel %vm1111, %v1086, 0
        %v1134 = vsel %vm1111, %v1087, 0
        %v1137 = vsel %vm1111, %v1088, 0
        %v1140 = vsel %vm1111, %v1089, 0
        %v1143 = vsel %vm1111, %v1090, 0
        %v1146 = vsel %vm1111, %v1091, 0
        %v1149 = vsel %vm1111, %v1092, 0
        %v1152 = vsel %vm1111, %v1093, 0
        %v1155 = vsel %vm1111, %v1094, 0
        %v1158 = vsel %vm1111, %v1095, 0
        %1160 = vmatprep.subr.bf16.mxu0 0
        %1161 = vmatpush1.bf16.msra.mxu0 0
        %1162 = vmatprep.subr.bf16.mxu0 0
        %1163 = vmatpush1.bf16.msra.mxu0 0
        %1164 = vmatprep.subr.bf16.mxu0 0
        %1165 = vmatpush1.bf16.msra.mxu0 0
        %1166 = vmatprep.subr.bf16.mxu0 0
        %1167 = vmatpush1.bf16.msra.mxu0 0
        %1168 = vmatprep.subr.bf16.mxu0 0
        %1169 = vmatpush1.bf16.msra.mxu0 0
        %1170 = vmatprep.subr.bf16.mxu0 0
        %1171 = vmatpush1.bf16.msra.mxu0 0
        %1172 = vmatprep.subr.bf16.mxu0 0
        %1173 = vmatpush1.bf16.msra.mxu0 0
        %1174 = vmatprep.subr.bf16.mxu0 0
        %1175 = vmatpush1.bf16.msra.mxu0 %v1109
        %1176 = vmatprep.subr.bf16.mxu0 0
        %1177 = vmatpush2.bf16.msra.mxu0 0
        %1178 = vmatprep.subr.bf16.mxu0 0
        %1179 = vmatpush2.bf16.msra.mxu0 0
        %1180 = vmatprep.subr.bf16.mxu0 0
        %1181 = vmatpush2.bf16.msra.mxu0 0
        %1182 = vmatprep.subr.bf16.mxu0 0
        %1183 = vmatpush2.bf16.msra.mxu0 0
        %1184 = vmatprep.subr.bf16.mxu0 0
        %1185 = vmatpush2.bf16.msra.mxu0 0
        %1186 = vmatprep.subr.bf16.mxu0 0
        %1187 = vmatpush2.bf16.msra.mxu0 0
        %1188 = vmatprep.subr.bf16.mxu0 0
        %1189 = vmatpush2.bf16.msra.mxu0 0
        %1190 = vmatprep.subr.bf16.mxu0 0
        %1191 = vmatpush2.bf16.msra.mxu0 0
        %1192 = vmatprep.mubr.bf16.mxu0 0
        %1193 = vmatmul.mubr.bf16.gmra.mxu0 %v1113
        %v1194 = vpop.f32.mrf.mxu0
        %v1195 = vadd.f32 %v1103, %v1194
        %v1196 = vpop.f32.mrf.mxu0
        %v1197 = vpop.f32.mrf.mxu0
        %v1198 = vadd.f32 %v1103, %v1197
        %v1199 = vpop.f32.mrf.mxu0
        %1200 = vmatprep.mubr.bf16.mxu0 0
        %1201 = vmatmul.mubr.bf16.gmra.mxu0 %v1116
        %v1202 = vpop.f32.mrf.mxu0
        %v1203 = vadd.f32 %v1103, %v1202
        %v1204 = vpop.f32.mrf.mxu0
        %v1205 = vpop.f32.mrf.mxu0
        %v1206 = vadd.f32 %v1103, %v1205
        %v1207 = vpop.f32.mrf.mxu0
        %1208 = vmatprep.mubr.bf16.mxu0 0
        %1209 = vmatmul.mubr.bf16.gmra.mxu0 %v1119
        %v1210 = vpop.f32.mrf.mxu0
        %v1211 = vadd.f32 %v1103, %v1210
        %v1212 = vpop.f32.mrf.mxu0
        %v1213 = vpop.f32.mrf.mxu0
        %v1214 = vadd.f32 %v1103, %v1213
        %v1215 = vpop.f32.mrf.mxu0
        %1216 = vmatprep.mubr.bf16.mxu0 0
        %1217 = vmatmul.mubr.bf16.gmra.mxu0 %v1122
        %v1218 = vpop.f32.mrf.mxu0
        %v1219 = vadd.f32 %v1103, %v1218
        %v1220 = vpop.f32.mrf.mxu0
        %v1221 = vpop.f32.mrf.mxu0
        %v1222 = vadd.f32 %v1103, %v1221
        %v1223 = vpop.f32.mrf.mxu0
        %1224 = vmatprep.mubr.bf16.mxu0 0
        %1225 = vmatmul.mubr.bf16.gmra.mxu0 %v1125
        %v1226 = vpop.f32.mrf.mxu0
        %v1227 = vadd.f32 %v1103, %v1226
        %v1228 = vpop.f32.mrf.mxu0
        %v1229 = vpop.f32.mrf.mxu0
        %v1230 = vadd.f32 %v1103, %v1229
        %v1231 = vpop.f32.mrf.mxu0
        %1232 = vmatprep.mubr.bf16.mxu0 0
        %1233 = vmatmul.mubr.bf16.gmra.mxu0 %v1128
        %v1234 = vpop.f32.mrf.mxu0
        %v1235 = vadd.f32 %v1103, %v1234
        %v1236 = vpop.f32.mrf.mxu0
        %v1237 = vpop.f32.mrf.mxu0
        %v1238 = vadd.f32 %v1103, %v1237
        %v1239 = vpop.f32.mrf.mxu0
        %1240 = vmatprep.mubr.bf16.mxu0 0
        %1241 = vmatmul.mubr.bf16.gmra.mxu0 %v1131
        %v1242 = vpop.f32.mrf.mxu0
        %v1243 = vadd.f32 %v1103, %v1242
        %v1244 = vpop.f32.mrf.mxu0
        %v1245 = vpop.f32.mrf.mxu0
        %v1246 = vadd.f32 %v1103, %v1245
        %v1247 = vpop.f32.mrf.mxu0
        %1248 = vmatprep.mubr.bf16.mxu0 0
        %1249 = vmatmul.mubr.bf16.gmra.mxu0 %v1134
        %v1250 = vpop.f32.mrf.mxu0
        %v1251 = vadd.f32 %v1103, %v1250
        %v1252 = vpop.f32.mrf.mxu0
        %v1253 = vpop.f32.mrf.mxu0
        %v1254 = vadd.f32 %v1103, %v1253
        %v1255 = vpop.f32.mrf.mxu0
        %1256 = vmatprep.mubr.bf16.mxu0 0
        %1257 = vmatmul.mubr.bf16.gmra.mxu0 %v1137
        %v1258 = vpop.f32.mrf.mxu0
        %v1259 = vadd.f32 %v1103, %v1258
        %v1260 = vpop.f32.mrf.mxu0
        %v1261 = vpop.f32.mrf.mxu0
        %v1262 = vadd.f32 %v1103, %v1261
        %v1263 = vpop.f32.mrf.mxu0
        %1264 = vmatprep.mubr.bf16.mxu0 0
        %1265 = vmatmul.mubr.bf16.gmra.mxu0 %v1140
        %v1266 = vpop.f32.mrf.mxu0
        %v1267 = vadd.f32 %v1103, %v1266
        %v1268 = vpop.f32.mrf.mxu0
        %v1269 = vpop.f32.mrf.mxu0
        %v1270 = vadd.f32 %v1103, %v1269
        %v1271 = vpop.f32.mrf.mxu0
        %1272 = vmatprep.mubr.bf16.mxu0 0
        %1273 = vmatmul.mubr.bf16.gmra.mxu0 %v1143
        %v1274 = vpop.f32.mrf.mxu0
        %v1275 = vadd.f32 %v1103, %v1274
        %v1276 = vpop.f32.mrf.mxu0
        %v1277 = vpop.f32.mrf.mxu0
        %v1278 = vadd.f32 %v1103, %v1277
        %v1279 = vpop.f32.mrf.mxu0
        %1280 = vmatprep.mubr.bf16.mxu0 0
        %1281 = vmatmul.mubr.bf16.gmra.mxu0 %v1146
        %v1282 = vpop.f32.mrf.mxu0
        %v1283 = vadd.f32 %v1103, %v1282
        %v1284 = vpop.f32.mrf.mxu0
        %v1285 = vpop.f32.mrf.mxu0
        %v1286 = vadd.f32 %v1103, %v1285
        %v1287 = vpop.f32.mrf.mxu0
        %1288 = vmatprep.mubr.bf16.mxu0 0
        %1289 = vmatmul.mubr.bf16.gmra.mxu0 %v1149
        %v1290 = vpop.f32.mrf.mxu0
        %v1291 = vadd.f32 %v1103, %v1290
        %v1292 = vpop.f32.mrf.mxu0
        %v1293 = vpop.f32.mrf.mxu0
        %v1294 = vadd.f32 %v1103, %v1293
        %v1295 = vpop.f32.mrf.mxu0
        %1296 = vmatprep.mubr.bf16.mxu0 0
        %1297 = vmatmul.mubr.bf16.gmra.mxu0 %v1152
        %v1298 = vpop.f32.mrf.mxu0
        %v1299 = vadd.f32 %v1103, %v1298
        %v1300 = vpop.f32.mrf.mxu0
        %v1301 = vpop.f32.mrf.mxu0
        %v1302 = vadd.f32 %v1103, %v1301
        %v1303 = vpop.f32.mrf.mxu0
        %1304 = vmatprep.mubr.bf16.mxu0 0
        %1305 = vmatmul.mubr.bf16.gmra.mxu0 %v1155
        %v1306 = vpop.f32.mrf.mxu0
        %v1307 = vadd.f32 %v1103, %v1306
        %v1308 = vpop.f32.mrf.mxu0
        %v1309 = vpop.f32.mrf.mxu0
        %v1310 = vadd.f32 %v1103, %v1309
        %v1311 = vpop.f32.mrf.mxu0
        %1312 = vmatprep.mubr.bf16.mxu0 0
        %1313 = vmatmul.mubr.bf16.gmra.mxu0 %v1158
        %v1314 = vpop.f32.mrf.mxu0
        %v1315 = vadd.f32 %v1103, %v1314
        %v1316 = vpop.f32.mrf.mxu0
        %v1317 = vpop.f32.mrf.mxu0
        %v1318 = vadd.f32 %v1103, %v1317
        %v1319 = vpop.f32.mrf.mxu0
        %1320 = vdwg.mxu0
        %1321 = vmax.xlane.f32.xlu0 %v1195
        %v1322 = vpop.xlane.xlu0 %1321
        %1323 = vmax.xlane.f32.xlu0 %v1198
        %v1324 = vpop.xlane.xlu0 %1323
        %1325 = vmax.xlane.f32.xlu0 %v1203
        %v1326 = vpop.xlane.xlu0 %1325
        %1327 = vmax.xlane.f32.xlu0 %v1206
        %v1328 = vpop.xlane.xlu0 %1327
        %1329 = vmax.xlane.f32.xlu0 %v1211
        %v1330 = vpop.xlane.xlu0 %1329
        %1331 = vmax.xlane.f32.xlu0 %v1214
        %v1332 = vpop.xlane.xlu0 %1331
        %1333 = vmax.xlane.f32.xlu0 %v1219
        %v1334 = vpop.xlane.xlu0 %1333
        %1335 = vmax.xlane.f32.xlu0 %v1222
        %v1336 = vpop.xlane.xlu0 %1335
        %1337 = vmax.xlane.f32.xlu0 %v1227
        %v1338 = vpop.xlane.xlu0 %1337
        %1339 = vmax.xlane.f32.xlu0 %v1230
        %v1340 = vpop.xlane.xlu0 %1339
        %1341 = vmax.xlane.f32.xlu0 %v1235
        %v1342 = vpop.xlane.xlu0 %1341
        %1343 = vmax.xlane.f32.xlu0 %v1238
        %v1344 = vpop.xlane.xlu0 %1343
        %1345 = vmax.xlane.f32.xlu0 %v1243
        %v1346 = vpop.xlane.xlu0 %1345
        %1347 = vmax.xlane.f32.xlu0 %v1246
        %v1348 = vpop.xlane.xlu0 %1347
        %1349 = vmax.xlane.f32.xlu0 %v1251
        %v1350 = vpop.xlane.xlu0 %1349
        %1351 = vmax.xlane.f32.xlu0 %v1254
        %v1352 = vpop.xlane.xlu0 %1351
        %1353 = vmax.xlane.f32.xlu0 %v1259
        %v1354 = vpop.xlane.xlu0 %1353
        %1355 = vmax.xlane.f32.xlu0 %v1262
        %v1356 = vpop.xlane.xlu0 %1355
        %1357 = vmax.xlane.f32.xlu0 %v1267
        %v1358 = vpop.xlane.xlu0 %1357
        %1359 = vmax.xlane.f32.xlu0 %v1270
        %v1360 = vpop.xlane.xlu0 %1359
        %1361 = vmax.xlane.f32.xlu0 %v1275
        %v1362 = vpop.xlane.xlu0 %1361
        %1363 = vmax.xlane.f32.xlu0 %v1278
        %v1364 = vpop.xlane.xlu0 %1363
        %1365 = vmax.xlane.f32.xlu0 %v1283
        %v1366 = vpop.xlane.xlu0 %1365
        %1367 = vmax.xlane.f32.xlu0 %v1286
        %v1368 = vpop.xlane.xlu0 %1367
        %1369 = vmax.xlane.f32.xlu0 %v1291
        %v1370 = vpop.xlane.xlu0 %1369
        %1371 = vmax.xlane.f32.xlu0 %v1294
        %v1372 = vpop.xlane.xlu0 %1371
        %1373 = vmax.xlane.f32.xlu0 %v1299
        %v1374 = vpop.xlane.xlu0 %1373
        %1375 = vmax.xlane.f32.xlu0 %v1302
        %v1376 = vpop.xlane.xlu0 %1375
        %1377 = vmax.xlane.f32.xlu0 %v1307
        %v1378 = vpop.xlane.xlu0 %1377
        %1379 = vmax.xlane.f32.xlu0 %v1310
        %v1380 = vpop.xlane.xlu0 %1379
        %1381 = vmax.xlane.f32.xlu0 %v1315
        %v1382 = vpop.xlane.xlu0 %1381
        %1383 = vmax.xlane.f32.xlu0 %v1318
        %v1384 = vpop.xlane.xlu0 %1383
        %v1385 = vsub.f32 %v1195, %v1322
        %v1386 = vsub.f32 %v1198, %v1324
        %v1387 = vsub.f32 %v1203, %v1326
        %v1388 = vsub.f32 %v1206, %v1328
        %v1389 = vsub.f32 %v1211, %v1330
        %v1390 = vsub.f32 %v1214, %v1332
        %v1391 = vsub.f32 %v1219, %v1334
        %v1392 = vsub.f32 %v1222, %v1336
        %v1393 = vsub.f32 %v1227, %v1338
        %v1394 = vsub.f32 %v1230, %v1340
        %v1395 = vsub.f32 %v1235, %v1342
        %v1396 = vsub.f32 %v1238, %v1344
        %v1397 = vsub.f32 %v1243, %v1346
        %v1398 = vsub.f32 %v1246, %v1348
        %v1399 = vsub.f32 %v1251, %v1350
        %v1400 = vsub.f32 %v1254, %v1352
        %v1401 = vsub.f32 %v1259, %v1354
        %v1402 = vsub.f32 %v1262, %v1356
        %v1403 = vsub.f32 %v1267, %v1358
        %v1404 = vsub.f32 %v1270, %v1360
        %v1405 = vsub.f32 %v1275, %v1362
        %v1406 = vsub.f32 %v1278, %v1364
        %v1407 = vsub.f32 %v1283, %v1366
        %v1408 = vsub.f32 %v1286, %v1368
        %v1409 = vsub.f32 %v1291, %v1370
        %v1410 = vsub.f32 %v1294, %v1372
        %v1411 = vsub.f32 %v1299, %v1374
        %v1412 = vsub.f32 %v1302, %v1376
        %v1413 = vsub.f32 %v1307, %v1378
        %v1414 = vsub.f32 %v1310, %v1380
        %v1415 = vsub.f32 %v1315, %v1382
        %v1416 = vsub.f32 %v1318, %v1384
        %v1417 = vmul.f32 %v1385, 1.442695
        %v1418 = vpow.pop %v1417
        %v1419 = vmul.f32 %v1386, 1.442695
        %v1420 = vpow.pop %v1419
        %v1421 = vmul.f32 %v1387, 1.442695
        %v1422 = vpow.pop %v1421
        %v1423 = vmul.f32 %v1388, 1.442695
        %v1424 = vpow.pop %v1423
        %v1425 = vmul.f32 %v1389, 1.442695
        %v1426 = vpow.pop %v1425
        %v1427 = vmul.f32 %v1390, 1.442695
        %v1428 = vpow.pop %v1427
        %v1429 = vmul.f32 %v1391, 1.442695
        %v1430 = vpow.pop %v1429
        %v1431 = vmul.f32 %v1392, 1.442695
        %v1432 = vpow.pop %v1431
        %v1433 = vmul.f32 %v1393, 1.442695
        %v1434 = vpow.pop %v1433
        %v1435 = vmul.f32 %v1394, 1.442695
        %v1436 = vpow.pop %v1435
        %v1437 = vmul.f32 %v1395, 1.442695
        %v1438 = vpow.pop %v1437
        %v1439 = vmul.f32 %v1396, 1.442695
        %v1440 = vpow.pop %v1439
        %v1441 = vmul.f32 %v1397, 1.442695
        %v1442 = vpow.pop %v1441
        %v1443 = vmul.f32 %v1398, 1.442695
        %v1444 = vpow.pop %v1443
        %v1445 = vmul.f32 %v1399, 1.442695
        %v1446 = vpow.pop %v1445
        %v1447 = vmul.f32 %v1400, 1.442695
        %v1448 = vpow.pop %v1447
        %v1449 = vmul.f32 %v1401, 1.442695
        %v1450 = vpow.pop %v1449
        %v1451 = vmul.f32 %v1402, 1.442695
        %v1452 = vpow.pop %v1451
        %v1453 = vmul.f32 %v1403, 1.442695
        %v1454 = vpow.pop %v1453
        %v1455 = vmul.f32 %v1404, 1.442695
        %v1456 = vpow.pop %v1455
        %v1457 = vmul.f32 %v1405, 1.442695
        %v1458 = vpow.pop %v1457
        %v1459 = vmul.f32 %v1406, 1.442695
        %v1460 = vpow.pop %v1459
        %v1461 = vmul.f32 %v1407, 1.442695
        %v1462 = vpow.pop %v1461
        %v1463 = vmul.f32 %v1408, 1.442695
        %v1464 = vpow.pop %v1463
        %v1465 = vmul.f32 %v1409, 1.442695
        %v1466 = vpow.pop %v1465
        %v1467 = vmul.f32 %v1410, 1.442695
        %v1468 = vpow.pop %v1467
        %v1469 = vmul.f32 %v1411, 1.442695
        %v1470 = vpow.pop %v1469
        %v1471 = vmul.f32 %v1412, 1.442695
        %v1472 = vpow.pop %v1471
        %v1473 = vmul.f32 %v1413, 1.442695
        %v1474 = vpow.pop %v1473
        %v1475 = vmul.f32 %v1414, 1.442695
        %v1476 = vpow.pop %v1475
        %v1477 = vmul.f32 %v1415, 1.442695
        %v1478 = vpow.pop %v1477
        %v1479 = vmul.f32 %v1416, 1.442695
        %v1480 = vpow.pop %v1479
        %v1481 = vld [vmem:[#allocation10] sm:$0xff]
        %v1482 = vld [vmem:[#allocation10 + $0x8] sm:$0xff]
        %v1483 = vld [vmem:[#allocation10 + $0x10] sm:$0xff]
        %v1484 = vld [vmem:[#allocation10 + $0x18] sm:$0xff]
        %v1485 = vld [vmem:[#allocation10 + $0x20] sm:$0xff]
        %v1486 = vld [vmem:[#allocation10 + $0x28] sm:$0xff]
        %v1487 = vld [vmem:[#allocation10 + $0x30] sm:$0xff]
        %v1488 = vld [vmem:[#allocation10 + $0x38] sm:$0xff]
        %v1489 = vld [vmem:[#allocation10 + $0x40] sm:$0xff]
        %v1490 = vld [vmem:[#allocation10 + $0x48] sm:$0xff]
        %v1491 = vld [vmem:[#allocation10 + $0x50] sm:$0xff]
        %v1492 = vld [vmem:[#allocation10 + $0x58] sm:$0xff]
        %v1493 = vld [vmem:[#allocation10 + $0x60] sm:$0xff]
        %v1494 = vld [vmem:[#allocation10 + $0x68] sm:$0xff]
        %v1495 = vld [vmem:[#allocation10 + $0x70] sm:$0xff]
        %v1496 = vld [vmem:[#allocation10 + $0x78] sm:$0xff]
        %1497 = vmatprep.subr.mxu0 0.0
        %1498 = vmatpush1.msra.mxu0 %v1496
        %1499 = vmatprep.subr.mxu0 0.0
        %1500 = vmatpush1.msra.mxu0 %v1495
        %1501 = vmatprep.subr.mxu0 0.0
        %1502 = vmatpush1.msra.mxu0 %v1494
        %1503 = vmatprep.subr.mxu0 0.0
        %1504 = vmatpush1.msra.mxu0 %v1493
        %1505 = vmatprep.subr.mxu0 0.0
        %1506 = vmatpush1.msra.mxu0 %v1492
        %1507 = vmatprep.subr.mxu0 0.0
        %1508 = vmatpush1.msra.mxu0 %v1491
        %1509 = vmatprep.subr.mxu0 0.0
        %1510 = vmatpush1.msra.mxu0 %v1490
        %1511 = vmatprep.subr.mxu0 0.0
        %1512 = vmatpush1.msra.mxu0 %v1489
        %1513 = vmatprep.subr.mxu0 0.0
        %1514 = vmatpush1.msra.mxu0 %v1488
        %1515 = vmatprep.subr.mxu0 0.0
        %1516 = vmatpush1.msra.mxu0 %v1487
        %1517 = vmatprep.subr.mxu0 0.0
        %1518 = vmatpush1.msra.mxu0 %v1486
        %1519 = vmatprep.subr.mxu0 0.0
        %1520 = vmatpush1.msra.mxu0 %v1485
        %1521 = vmatprep.subr.mxu0 0.0
        %1522 = vmatpush1.msra.mxu0 %v1484
        %1523 = vmatprep.subr.mxu0 0.0
        %1524 = vmatpush1.msra.mxu0 %v1483
        %1525 = vmatprep.subr.mxu0 0.0
        %1526 = vmatpush1.msra.mxu0 %v1482
        %1527 = vmatprep.subr.mxu0 0.0
        %1528 = vmatpush1.msra.mxu0 %v1481
        %1529 = vmatprep.subr.mxu0 0.0
        %1530 = vmatpush2.msra.mxu0 0.0
        %1531 = vmatprep.subr.mxu0 0.0
        %1532 = vmatpush2.msra.mxu0 0.0
        %1533 = vmatprep.subr.mxu0 0.0
        %1534 = vmatpush2.msra.mxu0 0.0
        %1535 = vmatprep.subr.mxu0 0.0
        %1536 = vmatpush2.msra.mxu0 0.0
        %1537 = vmatprep.subr.mxu0 0.0
        %1538 = vmatpush2.msra.mxu0 0.0
        %1539 = vmatprep.subr.mxu0 0.0
        %1540 = vmatpush2.msra.mxu0 0.0
        %1541 = vmatprep.subr.mxu0 0.0
        %1542 = vmatpush2.msra.mxu0 0.0
        %1543 = vmatprep.subr.mxu0 0.0
        %1544 = vmatpush2.msra.mxu0 0.0
        %1545 = vmatprep.subr.mxu0 0.0
        %1546 = vmatpush2.msra.mxu0 0.0
        %1547 = vmatprep.subr.mxu0 0.0
        %1548 = vmatpush2.msra.mxu0 0.0
        %1549 = vmatprep.subr.mxu0 0.0
        %1550 = vmatpush2.msra.mxu0 0.0
        %1551 = vmatprep.subr.mxu0 0.0
        %1552 = vmatpush2.msra.mxu0 0.0
        %1553 = vmatprep.subr.mxu0 0.0
        %1554 = vmatpush2.msra.mxu0 0.0
        %1555 = vmatprep.subr.mxu0 0.0
        %1556 = vmatpush2.msra.mxu0 0.0
        %1557 = vmatprep.subr.mxu0 0.0
        %1558 = vmatpush2.msra.mxu0 0.0
        %1559 = vmatprep.subr.mxu0 0.0
        %1560 = vmatpush2.msra.mxu0 0.0
        %1561 = vmatprep.mubr.f32.mxu0 0.0
        %1562 = vmatmul.mubr.f32.gmra.mxu0 %v1418
        %v1563 = vpop.f32.mrf.mxu0
        %v1564 = vadd.f32 0.0, %v1563
        %v1565 = vpop.f32.mrf.mxu0
        %1566 = vmatprep.mubr.f32.mxu0 0.0
        %1567 = vmatmul.mubr.f32.gmra.mxu0 %v1420
        %v1568 = vpop.f32.mrf.mxu0
        %v1569 = vadd.f32 0.0, %v1568
        %v1570 = vpop.f32.mrf.mxu0
        %1571 = vmatprep.mubr.f32.mxu0 0.0
        %1572 = vmatmul.mubr.f32.gmra.mxu0 %v1422
        %v1573 = vpop.f32.mrf.mxu0
        %v1574 = vadd.f32 0.0, %v1573
        %v1575 = vpop.f32.mrf.mxu0
        %1576 = vmatprep.mubr.f32.mxu0 0.0
        %1577 = vmatmul.mubr.f32.gmra.mxu0 %v1424
        %v1578 = vpop.f32.mrf.mxu0
        %v1579 = vadd.f32 0.0, %v1578
        %v1580 = vpop.f32.mrf.mxu0
        %1581 = vmatprep.mubr.f32.mxu0 0.0
        %1582 = vmatmul.mubr.f32.gmra.mxu0 %v1426
        %v1583 = vpop.f32.mrf.mxu0
        %v1584 = vadd.f32 0.0, %v1583
        %v1585 = vpop.f32.mrf.mxu0
        %1586 = vmatprep.mubr.f32.mxu0 0.0
        %1587 = vmatmul.mubr.f32.gmra.mxu0 %v1428
        %v1588 = vpop.f32.mrf.mxu0
        %v1589 = vadd.f32 0.0, %v1588
        %v1590 = vpop.f32.mrf.mxu0
        %1591 = vmatprep.mubr.f32.mxu0 0.0
        %1592 = vmatmul.mubr.f32.gmra.mxu0 %v1430
        %v1593 = vpop.f32.mrf.mxu0
        %v1594 = vadd.f32 0.0, %v1593
        %v1595 = vpop.f32.mrf.mxu0
        %1596 = vmatprep.mubr.f32.mxu0 0.0
        %1597 = vmatmul.mubr.f32.gmra.mxu0 %v1432
        %v1598 = vpop.f32.mrf.mxu0
        %v1599 = vadd.f32 0.0, %v1598
        %v1600 = vpop.f32.mrf.mxu0
        %1601 = vmatprep.mubr.f32.mxu0 0.0
        %1602 = vmatmul.mubr.f32.gmra.mxu0 %v1434
        %v1603 = vpop.f32.mrf.mxu0
        %v1604 = vadd.f32 0.0, %v1603
        %v1605 = vpop.f32.mrf.mxu0
        %1606 = vmatprep.mubr.f32.mxu0 0.0
        %1607 = vmatmul.mubr.f32.gmra.mxu0 %v1436
        %v1608 = vpop.f32.mrf.mxu0
        %v1609 = vadd.f32 0.0, %v1608
        %v1610 = vpop.f32.mrf.mxu0
        %1611 = vmatprep.mubr.f32.mxu0 0.0
        %1612 = vmatmul.mubr.f32.gmra.mxu0 %v1438
        %v1613 = vpop.f32.mrf.mxu0
        %v1614 = vadd.f32 0.0, %v1613
        %v1615 = vpop.f32.mrf.mxu0
        %1616 = vmatprep.mubr.f32.mxu0 0.0
        %1617 = vmatmul.mubr.f32.gmra.mxu0 %v1440
        %v1618 = vpop.f32.mrf.mxu0
        %v1619 = vadd.f32 0.0, %v1618
        %v1620 = vpop.f32.mrf.mxu0
        %1621 = vmatprep.mubr.f32.mxu0 0.0
        %1622 = vmatmul.mubr.f32.gmra.mxu0 %v1442
        %v1623 = vpop.f32.mrf.mxu0
        %v1624 = vadd.f32 0.0, %v1623
        %v1625 = vpop.f32.mrf.mxu0
        %1626 = vmatprep.mubr.f32.mxu0 0.0
        %1627 = vmatmul.mubr.f32.gmra.mxu0 %v1444
        %v1628 = vpop.f32.mrf.mxu0
        %v1629 = vadd.f32 0.0, %v1628
        %v1630 = vpop.f32.mrf.mxu0
        %1631 = vmatprep.mubr.f32.mxu0 0.0
        %1632 = vmatmul.mubr.f32.gmra.mxu0 %v1446
        %v1633 = vpop.f32.mrf.mxu0
        %v1634 = vadd.f32 0.0, %v1633
        %v1635 = vpop.f32.mrf.mxu0
        %1636 = vmatprep.mubr.f32.mxu0 0.0
        %1637 = vmatmul.mubr.f32.gmra.mxu0 %v1448
        %v1638 = vpop.f32.mrf.mxu0
        %v1639 = vadd.f32 0.0, %v1638
        %v1640 = vpop.f32.mrf.mxu0
        %1641 = vmatprep.mubr.f32.mxu0 0.0
        %1642 = vmatmul.mubr.f32.gmra.mxu0 %v1450
        %v1643 = vpop.f32.mrf.mxu0
        %v1644 = vadd.f32 0.0, %v1643
        %v1645 = vpop.f32.mrf.mxu0
        %1646 = vmatprep.mubr.f32.mxu0 0.0
        %1647 = vmatmul.mubr.f32.gmra.mxu0 %v1452
        %v1648 = vpop.f32.mrf.mxu0
        %v1649 = vadd.f32 0.0, %v1648
        %v1650 = vpop.f32.mrf.mxu0
        %1651 = vmatprep.mubr.f32.mxu0 0.0
        %1652 = vmatmul.mubr.f32.gmra.mxu0 %v1454
        %v1653 = vpop.f32.mrf.mxu0
        %v1654 = vadd.f32 0.0, %v1653
        %v1655 = vpop.f32.mrf.mxu0
        %1656 = vmatprep.mubr.f32.mxu0 0.0
        %1657 = vmatmul.mubr.f32.gmra.mxu0 %v1456
        %v1658 = vpop.f32.mrf.mxu0
        %v1659 = vadd.f32 0.0, %v1658
        %v1660 = vpop.f32.mrf.mxu0
        %1661 = vmatprep.mubr.f32.mxu0 0.0
        %1662 = vmatmul.mubr.f32.gmra.mxu0 %v1458
        %v1663 = vpop.f32.mrf.mxu0
        %v1664 = vadd.f32 0.0, %v1663
        %v1665 = vpop.f32.mrf.mxu0
        %1666 = vmatprep.mubr.f32.mxu0 0.0
        %1667 = vmatmul.mubr.f32.gmra.mxu0 %v1460
        %v1668 = vpop.f32.mrf.mxu0
        %v1669 = vadd.f32 0.0, %v1668
        %v1670 = vpop.f32.mrf.mxu0
        %1671 = vmatprep.mubr.f32.mxu0 0.0
        %1672 = vmatmul.mubr.f32.gmra.mxu0 %v1462
        %v1673 = vpop.f32.mrf.mxu0
        %v1674 = vadd.f32 0.0, %v1673
        %v1675 = vpop.f32.mrf.mxu0
        %1676 = vmatprep.mubr.f32.mxu0 0.0
        %1677 = vmatmul.mubr.f32.gmra.mxu0 %v1464
        %v1678 = vpop.f32.mrf.mxu0
        %v1679 = vadd.f32 0.0, %v1678
        %v1680 = vpop.f32.mrf.mxu0
        %1681 = vmatprep.mubr.f32.mxu0 0.0
        %1682 = vmatmul.mubr.f32.gmra.mxu0 %v1466
        %v1683 = vpop.f32.mrf.mxu0
        %v1684 = vadd.f32 0.0, %v1683
        %v1685 = vpop.f32.mrf.mxu0
        %1686 = vmatprep.mubr.f32.mxu0 0.0
        %1687 = vmatmul.mubr.f32.gmra.mxu0 %v1468
        %v1688 = vpop.f32.mrf.mxu0
        %v1689 = vadd.f32 0.0, %v1688
        %v1690 = vpop.f32.mrf.mxu0
        %1691 = vmatprep.mubr.f32.mxu0 0.0
        %1692 = vmatmul.mubr.f32.gmra.mxu0 %v1470
        %v1693 = vpop.f32.mrf.mxu0
        %v1694 = vadd.f32 0.0, %v1693
        %v1695 = vpop.f32.mrf.mxu0
        %1696 = vmatprep.mubr.f32.mxu0 0.0
        %1697 = vmatmul.mubr.f32.gmra.mxu0 %v1472
        %v1698 = vpop.f32.mrf.mxu0
        %v1699 = vadd.f32 0.0, %v1698
        %v1700 = vpop.f32.mrf.mxu0
        %1701 = vmatprep.mubr.f32.mxu0 0.0
        %1702 = vmatmul.mubr.f32.gmra.mxu0 %v1474
        %v1703 = vpop.f32.mrf.mxu0
        %v1704 = vadd.f32 0.0, %v1703
        %v1705 = vpop.f32.mrf.mxu0
        %1706 = vmatprep.mubr.f32.mxu0 0.0
        %1707 = vmatmul.mubr.f32.gmra.mxu0 %v1476
        %v1708 = vpop.f32.mrf.mxu0
        %v1709 = vadd.f32 0.0, %v1708
        %v1710 = vpop.f32.mrf.mxu0
        %1711 = vmatprep.mubr.f32.mxu0 0.0
        %1712 = vmatmul.mubr.f32.gmra.mxu0 %v1478
        %v1713 = vpop.f32.mrf.mxu0
        %v1714 = vadd.f32 0.0, %v1713
        %v1715 = vpop.f32.mrf.mxu0
        %1716 = vmatprep.mubr.f32.mxu0 0.0
        %1717 = vmatmul.mubr.f32.gmra.mxu0 %v1480
        %v1718 = vpop.f32.mrf.mxu0
        %v1719 = vadd.f32 0.0, %v1718
        %v1720 = vpop.f32.mrf.mxu0
        %1721 = vdwg.mxu0
        %v1722 = vrcp.pop %v1564
        %v1723 = vrcp.pop %v1569
        %v1724 = vrcp.pop %v1574
        %v1725 = vrcp.pop %v1579
        %v1726 = vrcp.pop %v1584
        %v1727 = vrcp.pop %v1589
        %v1728 = vrcp.pop %v1594
        %v1729 = vrcp.pop %v1599
        %v1730 = vrcp.pop %v1604
        %v1731 = vrcp.pop %v1609
        %v1732 = vrcp.pop %v1614
        %v1733 = vrcp.pop %v1619
        %v1734 = vrcp.pop %v1624
        %v1735 = vrcp.pop %v1629
        %v1736 = vrcp.pop %v1634
        %v1737 = vrcp.pop %v1639
        %v1738 = vrcp.pop %v1644
        %v1739 = vrcp.pop %v1649
        %v1740 = vrcp.pop %v1654
        %v1741 = vrcp.pop %v1659
        %v1742 = vrcp.pop %v1664
        %v1743 = vrcp.pop %v1669
        %v1744 = vrcp.pop %v1674
        %v1745 = vrcp.pop %v1679
        %v1746 = vrcp.pop %v1684
        %v1747 = vrcp.pop %v1689
        %v1748 = vrcp.pop %v1694
        %v1749 = vrcp.pop %v1699
        %v1750 = vrcp.pop %v1704
        %v1751 = vrcp.pop %v1709
        %v1752 = vrcp.pop %v1714
        %v1753 = vrcp.pop %v1719
        %v1754 = vmul.f32 %v1418, %v1722
        %v1755 = vmul.f32 %v1420, %v1723
        %v1756 = vmul.f32 %v1422, %v1724
        %v1757 = vmul.f32 %v1424, %v1725
        %v1758 = vmul.f32 %v1426, %v1726
        %v1759 = vmul.f32 %v1428, %v1727
        %v1760 = vmul.f32 %v1430, %v1728
        %v1761 = vmul.f32 %v1432, %v1729
        %v1762 = vmul.f32 %v1434, %v1730
        %v1763 = vmul.f32 %v1436, %v1731
        %v1764 = vmul.f32 %v1438, %v1732
        %v1765 = vmul.f32 %v1440, %v1733
        %v1766 = vmul.f32 %v1442, %v1734
        %v1767 = vmul.f32 %v1444, %v1735
        %v1768 = vmul.f32 %v1446, %v1736
        %v1769 = vmul.f32 %v1448, %v1737
        %v1770 = vmul.f32 %v1450, %v1738
        %v1771 = vmul.f32 %v1452, %v1739
        %v1772 = vmul.f32 %v1454, %v1740
        %v1773 = vmul.f32 %v1456, %v1741
        %v1774 = vmul.f32 %v1458, %v1742
        %v1775 = vmul.f32 %v1460, %v1743
        %v1776 = vmul.f32 %v1462, %v1744
        %v1777 = vmul.f32 %v1464, %v1745
        %v1778 = vmul.f32 %v1466, %v1746
        %v1779 = vmul.f32 %v1468, %v1747
        %v1780 = vmul.f32 %v1470, %v1748
        %v1781 = vmul.f32 %v1472, %v1749
        %v1782 = vmul.f32 %v1474, %v1750
        %v1783 = vmul.f32 %v1476, %v1751
        %v1784 = vmul.f32 %v1478, %v1752
        %v1785 = vmul.f32 %v1480, %v1753
        %1786 = vst [vmem:[%s423] sm:$0xff] %v1754
        %1787 = vst [vmem:[%s423 + $0x8] sm:$0xff] %v1755
        %1788 = vst [vmem:[%s423 + $0x10] sm:$0xff] %v1756
        %1789 = vst [vmem:[%s423 + $0x18] sm:$0xff] %v1757
        %1790 = vst [vmem:[%s423 + $0x20] sm:$0xff] %v1758
        %1791 = vst [vmem:[%s423 + $0x28] sm:$0xff] %v1759
        %1792 = vst [vmem:[%s423 + $0x30] sm:$0xff] %v1760
        %1793 = vst [vmem:[%s423 + $0x38] sm:$0xff] %v1761
        %1794 = vst [vmem:[%s423 + $0x40] sm:$0xff] %v1762
        %1795 = vst [vmem:[%s423 + $0x48] sm:$0xff] %v1763
        %1796 = vst [vmem:[%s423 + $0x50] sm:$0xff] %v1764
        %1797 = vst [vmem:[%s423 + $0x58] sm:$0xff] %v1765
        %1798 = vst [vmem:[%s423 + $0x60] sm:$0xff] %v1766
        %1799 = vst [vmem:[%s423 + $0x68] sm:$0xff] %v1767
        %1800 = vst [vmem:[%s423 + $0x70] sm:$0xff] %v1768
        %1801 = vst [vmem:[%s423 + $0x78] sm:$0xff] %v1769
        %1802 = vst [vmem:[%s423 + $0x80] sm:$0xff] %v1770
        %1803 = vst [vmem:[%s423 + $0x88] sm:$0xff] %v1771
        %1804 = vst [vmem:[%s423 + $0x90] sm:$0xff] %v1772
        %1805 = vst [vmem:[%s423 + $0x98] sm:$0xff] %v1773
        %1806 = vst [vmem:[%s423 + $0xa0] sm:$0xff] %v1774
        %1807 = vst [vmem:[%s423 + $0xa8] sm:$0xff] %v1775
        %1808 = vst [vmem:[%s423 + $0xb0] sm:$0xff] %v1776
        %1809 = vst [vmem:[%s423 + $0xb8] sm:$0xff] %v1777
        %1810 = vst [vmem:[%s423 + $0xc0] sm:$0xff] %v1778
        %1811 = vst [vmem:[%s423 + $0xc8] sm:$0xff] %v1779
        %1812 = vst [vmem:[%s423 + $0xd0] sm:$0xff] %v1780
        %1813 = vst [vmem:[%s423 + $0xd8] sm:$0xff] %v1781
        %1814 = vst [vmem:[%s423 + $0xe0] sm:$0xff] %v1782
        %1815 = vst [vmem:[%s423 + $0xe8] sm:$0xff] %v1783
        %1816 = vst [vmem:[%s423 + $0xf0] sm:$0xff] %v1784
        %1817 = vst [vmem:[%s423 + $0xf8] sm:$0xff] %v1785
        %s1818 = smul.u32 32, %s28
        %p1819 = scmp.lt.s32.totalorder %s27, 1
        %s1820 = scalar_select %p1819, %s27, 1
        %p1821 = scmp.lt.s32.totalorder %s1818, 31
        %s1822 = scalar_select %p1821, %s1818, 31
        %s1823 = smul.addr %s1820, 32
        %s1824 = sadd.s32 %s1822, %s1823
        %s1825 = smul.addr %s1824, 8
        %s1826 = scalar_lea.vmem %s8, %s1825
        // Predicated region
        $region77: #{dbhead_test_forward.1} parent=51 // pred_check
          %p1827 = pneg %p230
        $region78: #{dbhead_test_forward.1} parent=51 // pred_check_branch
          %1829 = sbr.rel (%p1827) target = $region80
        $region79: #{dbhead_test_forward.1} parent=51 // pred_region
          %s1830 = smul.u32 32, %s28
        $region80: #{dbhead_test_forward.1} parent=51 // pred_fallthru
          _
      $region52: #{dbhead_test_forward.1} parent=5 // pred_fallthru
        _
      %p1831 = scmp.le.s32.totalorder 2, %s18
      // Predicated region
      $region81: #{dbhead_test_forward.1} parent=5 // pred_check
        %p1832 = pneg %p1831
      $region82: #{dbhead_test_forward.1} parent=5 // pred_check_branch
        %1834 = sbr.rel (%p1832) target = $region84
      $region83: #{dbhead_test_forward.1} parent=5 // pred_region
        %s1835 = ssub.s32 %s18, 2
        // Predicated region
        $region85: #{dbhead_test_forward.1} parent=83 // pred_check
          %p1836 = pneg %p236
        $region86: #{dbhead_test_forward.1} parent=83 // pred_check_branch
          %1838 = sbr.rel (%p1836) target = $region88
        $region87: #{dbhead_test_forward.1} parent=83 // pred_region
          %s1839 = smul.u32 32, %s30
          %p1840 = scmp.lt.s32.totalorder %s29, 1
          %s1841 = scalar_select %p1840, %s29, 1
          %p1842 = scmp.lt.s32.totalorder %s1839, 31
          %s1843 = scalar_select %p1842, %s1839, 31
          %s1844 = smul.addr %s1841, 32
          %s1845 = sadd.s32 %s1843, %s1844
          %s1846 = smul.addr %s1845, 8
          %s1847 = scalar_lea.vmem %s8, %s1846
        $region88: #{dbhead_test_forward.1} parent=83 // pred_fallthru
          _
      $region84: #{dbhead_test_forward.1} parent=5 // pred_fallthru
        _
    $region6: #{dbhead_test_forward.1} parent=1 // loop_footer
      %s22 = sadd.s32 1, %s18
    $region7: #{dbhead_test_forward.1} parent=1 // loop_footer_branch
      %17 = sbr.rel target = $region3
    $region8: #{dbhead_test_forward.1} parent=1 // loop_exit
      _
    %1848 = vsyncpa [#allocation3], 1
    %s1849 = scalar_lea.sflag [#allocation3], 1
    %1850 = vsyncpa %s1849, 1
    %1851 = vsyncpa [#allocation5], 1
    %1852 = vsyncpa [#allocation8], 1
    %1853 = vsyncpa [#allocation11], 1

</llo_original>
